<compile_context>
chip_gen: v6e
topology: v6e:2x2x1
jax: 0.10.0
libtpu: 0.0.40
codegen_flags: <defaults>
</compile_context>

<pallas_src>
import functools

import jax
import jax.numpy as jnp
from jax.experimental import pallas as pl
from jax.experimental.pallas import tpu as pltpu


# ----------------------------------------------------------------------------
# Fused kernel: latent-action MLP + VQ quantization + Markov dynamics
# (one row tile of flattened (batch*time*slot) rows per grid step)
# ----------------------------------------------------------------------------
def _make_fused_kernel(D, A, K, pack_w):
    def kernel(x_ref, w1_ref, b1_ref, w2a_ref, b2a_ref,
               cbt_ref, cbsq_ref, cb_ref, dwa_ref, dw2_ref, db2_ref,
               out_ref):
        x = x_ref[...]                                    # (tm, 2D) = [prev|next]
        cd = x.dtype

        # --- stacked first layer: one K=2D, N=H_la+H_dy matmul -------------------
        #   cols [:H_la]  -> latent-action encoder pre-activation
        #   cols [H_la:]  -> dynamics pre-activation (action term added later)
        h_pre = (jnp.dot(x, w1_ref[...], preferred_element_type=jnp.float32)
                 + b1_ref[...])                           # (tm, H) f32

        # --- latent-action encoder second layer ----------------------------------
        # w2a has zero rows for the dynamics half, so relu-ing the whole slab is
        # harmless and no lane slice of h_pre is required.
        h_enc = jnp.maximum(h_pre, 0.0)
        a = (jnp.dot(h_enc.astype(cd), w2a_ref[...],
                     preferred_element_type=jnp.float32)
             + b2a_ref[...])                              # (tm, A) f32

        # --- VQ nearest prototype (f32): argmin_k  -2*a.c_k + ||c_k||^2 ----------
        d = (-2.0 * jnp.dot(a, cbt_ref[...], preferred_element_type=jnp.float32)
             + cbsq_ref[...])                             # (tm, K)
        k_iota = jax.lax.broadcasted_iota(jnp.int32, d.shape, 1)
        d_min = jnp.min(d, axis=-1, keepdims=True)
        idx = jnp.min(jnp.where(d == d_min, k_iota, K), axis=-1, keepdims=True)
        onehot = (k_iota == idx).astype(jnp.float32)      # (tm, K)
        proto = jnp.dot(onehot, cb_ref[...],
                        preferred_element_type=jnp.float32)   # (tm, A)

        # --- Markov dynamics, condition_mode='concat' -----------------------------
        # dwa has zero columns for the encoder half, dw2 zero rows for it, so the
        # full-width h_pre slab can be reused without lane slicing.
        hd = jnp.maximum(
            h_pre + jnp.dot(proto.astype(cd), dwa_ref[...],
                            preferred_element_type=jnp.float32), 0.0)
        delta = (jnp.dot(hd.astype(cd), dw2_ref[...],
                         preferred_element_type=jnp.float32)
                 + db2_ref[...])                          # (tm, D)
        pred = x[:, :D].astype(jnp.float32) + delta       # residual

        # --- pack all per-row results into one lane-dense 128-wide f32 slab -------
        #   [ pred(D) | proto(A) | idx(1) | per-row VQ commitment(1) | zeros ]
        # The out block is 128 lanes wide -> the HBM writeback is a full unmasked
        # DMA; the few masked VMEM stores below are noise next to the matmuls.
        out_ref[:, :D] = pred
        out_ref[:, D:D + A] = proto
        out_ref[:, D + A:D + A + 1] = idx.astype(jnp.float32)
        diff = a - proto
        out_ref[:, D + A + 1:D + A + 2] = jnp.sum(diff * diff, axis=-1,
                                                  keepdims=True)
        if D + A + 2 < pack_w:
            out_ref[:, D + A + 2:] = jnp.zeros(
                (x.shape[0], pack_w - (D + A + 2)), jnp.float32)

    return kernel


def _pick_tile(M, tm, align):
    """Row tile: multiple of `align`, no row padding, and >=2 grid steps when
    possible so the 'parallel' axis can shard across v7x's two TensorCores."""
    tm = max(align, (min(tm, M) // align) * align)
    if M > 2 * align and pl.cdiv(M, tm) < 2:
        tm = max(align, (pl.cdiv(M, 2) // align) * align)
    if tm > M:
        tm = M                      # single full-extent block (divisibility waived)
    return tm


def fused_predictor_pallas(x_flat, params, *, slot_dim, tm=128):
    """Runs the fused latent-action + dynamics kernel over flattened rows.

    x_flat: (M, 2*slot_dim) = [prev | next], already in the compute dtype.
    Returns a packed (M, 128) f32 slab: [pred(D) | proto(A) | idx | vq_row | 0]."""
    M, twoD = x_flat.shape
    D = slot_dim
    cd = x_flat.dtype
    f32 = jnp.float32

    H_la = params["la_w1p"].shape[1]
    H_dy = params["dy_w1s"].shape[1]
    H = H_la + H_dy
    A = params["la_w2"].shape[1]
    K = params["codebook"].shape[0]

    # Stacked / zero-padded weights (tiny, built once per traced call).
    w1 = jnp.concatenate(
        [jnp.concatenate([params["la_w1p"], params["dy_w1s"]], axis=1),
         jnp.concatenate([params["la_w1n"], jnp.zeros((D, H_dy), f32)], axis=1)],
        axis=0).astype(cd)                                        # (2D, H)
    b1 = jnp.concatenate([params["la_b1"], params["dy_b1"]], axis=1)      # (1, H)
    w2a = jnp.concatenate([params["la_w2"],
                           jnp.zeros((H_dy, A), f32)], axis=0).astype(cd)  # (H, A)
    dwa = jnp.concatenate([jnp.zeros((A, H_la), f32),
                           params["dy_w1a"]], axis=1).astype(cd)          # (A, H)
    dw2 = jnp.concatenate([jnp.zeros((H_la, D), f32),
                           params["dy_w2"]], axis=0).astype(cd)           # (H, D)
    cb = params["codebook"].astype(f32)                                   # (K, A)
    cbt = cb.T                                                            # (A, K)
    cbsq = jnp.sum(cb * cb, axis=-1)[None, :]                             # (1, K)

    pack_w = max(128, pl.cdiv(D + A + 2, 128) * 128)
    align = 16 if cd == jnp.bfloat16 else 8
    tm = _pick_tile(M, tm, align)
    grid = pl.cdiv(M, tm)

    kernel = _make_fused_kernel(D, A, K, pack_w)
    full = lambda i: (0, 0)

    out = pl.pallas_call(
        kernel,
        out_shape=jax.ShapeDtypeStruct((M, pack_w), jnp.float32),
        grid=(grid,),
        in_specs=[pl.BlockSpec((tm, twoD), lambda i: (i, 0)),   # [prev|next] rows
                  pl.BlockSpec((twoD, H), full),                # stacked W1
                  pl.BlockSpec((1, H), full),                   # stacked b1
                  pl.BlockSpec((H, A), full),                   # padded la_w2
                  pl.BlockSpec((1, A), full),                   # la_b2
                  pl.BlockSpec((A, K), full),                   # codebook^T
                  pl.BlockSpec((1, K), full),                   # ||c||^2
                  pl.BlockSpec((K, A), full),                   # codebook
                  pl.BlockSpec((A, H), full),                   # padded dy_w1a
                  pl.BlockSpec((H, D), full),                   # padded dy_w2
                  pl.BlockSpec((1, D), full)],                  # dy_b2
        out_specs=pl.BlockSpec((tm, pack_w), lambda i: (i, 0)),
        compiler_params=pltpu.CompilerParams(
            dimension_semantics=("parallel",)),
    )(x_flat, w1, b1, w2a, params["la_b2"], cbt, cbsq, cb, dwa, dw2,
      params["dy_b2"])
    return out


# ----------------------------------------------------------------------------
# SlotLatentPredictor.forward (Pallas-backed)
# ----------------------------------------------------------------------------
def slot_latent_predictor_forward(slots, params, num_seed, num_preds,
                                  tm=128, compute_dtype=jnp.bfloat16):
    B, num_frames, S, D = slots.shape
    if num_frames < num_seed + num_preds:
        raise ValueError("num_frames must be >= num_seed + num_preds")
    if num_frames > num_seed + num_preds:
        slots = slots[:, :num_seed + num_preds]
    T = num_seed + num_preds
    A = params["codebook"].shape[1]
    M = B * (T - 1) * S

    # Lane-dense [prev | next] input slab, cast to the MXU compute dtype.
    x = jnp.concatenate([slots[:, :-1], slots[:, 1:]], axis=-1)
    x = x.reshape(M, 2 * D).astype(compute_dtype)

    out = fused_predictor_pallas(x, params, slot_dim=D, tm=tm)    # (M, 128) f32

    pred_slots = out[:, :D].reshape(B, T - 1, S, D)
    action_proto = out[:, D:D + A].reshape(B, T - 1, S, A)
    action_idx = out[:, D + A].astype(jnp.int32).reshape(B, T - 1, S)
    vq_loss = jnp.sum(out[:, D + A + 1]) / (M * A)     # mean commitment term

    model_out = {"pred_slots": pred_slots, "action_proto": action_proto,
                 "action_idx": action_idx, "vq_loss": vq_loss}
    return pred_slots, model_out


# ----------------------------------------------------------------------------
# Pure-JAX reference (same precision policy: dtype-cast matmul operands,
# f32 accumulation, f32 VQ) for correctness check
# ----------------------------------------------------------------------------
def _reference_forward(slots, params, num_seed, num_preds,
                       compute_dtype=jnp.bfloat16):
    f32 = jnp.float32
    c = lambda t: t.astype(compute_dtype)
    slots = slots[:, :num_seed + num_preds]
    prev, nxt = slots[:, :-1], slots[:, 1:]
    h = jax.nn.relu(
        jnp.dot(c(prev), c(params["la_w1p"]), preferred_element_type=f32)
        + jnp.dot(c(nxt), c(params["la_w1n"]), preferred_element_type=f32)
        + params["la_b1"][0])
    a = (jnp.dot(c(h), c(params["la_w2"]), preferred_element_type=f32)
         + params["la_b2"][0])
    cb = params["codebook"]
    d = jnp.sum((a[..., None, :] - cb) ** 2, axis=-1)
    idx = jnp.argmin(d, axis=-1)
    proto = cb[idx]
    hd = jax.nn.relu(
        jnp.dot(c(prev), c(params["dy_w1s"]), preferred_element_type=f32)
        + jnp.dot(c(proto), c(params["dy_w1a"]), preferred_element_type=f32)
        + params["dy_b1"][0])
    delta = (jnp.dot(c(hd), c(params["dy_w2"]), preferred_element_type=f32)
             + params["dy_b2"][0])
    pred = c(prev).astype(f32) + delta
    vq_loss = jnp.mean((a - proto) ** 2)
    return pred, proto, idx, vq_loss


def _init_params(key, slot_dim, action_dim, num_actions, hidden_la, hidden_dy):
    ks = jax.random.split(key, 8)
    s = 0.1
    return {
        "la_w1p": s * jax.random.normal(ks[0], (slot_dim, hidden_la), jnp.float32),
        "la_w1n": s * jax.random.normal(ks[6], (slot_dim, hidden_la), jnp.float32),
        "la_b1": jnp.zeros((1, hidden_la), jnp.float32),
        "la_w2": s * jax.random.normal(ks[1], (hidden_la, action_dim), jnp.float32),
        "la_b2": jnp.zeros((1, action_dim), jnp.float32),
        "codebook": jax.random.normal(ks[2], (num_actions, action_dim), jnp.float32),
        "dy_w1s": s * jax.random.normal(ks[3], (slot_dim, hidden_dy), jnp.float32),
        "dy_w1a": s * jax.random.normal(ks[4], (action_dim, hidden_dy), jnp.float32),
        "dy_b1": jnp.zeros((1, hidden_dy), jnp.float32),
        "dy_w2": s * jax.random.normal(ks[5], (hidden_dy, slot_dim), jnp.float32),
        "dy_b2": jnp.zeros((1, slot_dim), jnp.float32),
    }


def _check(slots, params, num_seed, num_preds, tm, compute_dtype, tol):
    fwd = jax.jit(functools.partial(
        slot_latent_predictor_forward, num_seed=num_seed, num_preds=num_preds,
        tm=tm, compute_dtype=compute_dtype))
    pred_slots, model_out = fwd(slots, params)
    jax.block_until_ready(pred_slots)

    ref_pred, ref_proto, ref_idx, ref_vq = _reference_forward(
        slots, params, num_seed, num_preds, compute_dtype)
    B, _, S, D = slots.shape
    assert pred_slots.shape == (B, num_seed + num_preds - 1, S, D)

    # The kernel's expanded-form VQ distance can, in principle, flip exact
    # near-ties; tolerate (vanishingly rare) flips and compare matched rows.
    match = model_out["action_idx"] == ref_idx
    assert jnp.mean(match.astype(jnp.float32)) > 0.99
    m = match[..., None]
    assert jnp.allclose(jnp.where(m, model_out["action_proto"] - ref_proto, 0.0),
                        0.0, atol=tol)
    assert jnp.allclose(jnp.where(m, pred_slots - ref_pred, 0.0), 0.0, atol=tol)
    assert jnp.allclose(model_out["vq_loss"], ref_vq, atol=1e-3, rtol=1e-2)


if __name__ == "__main__":
    slot_dim, action_dim, num_actions = 32, 32, 8
    hidden_la, hidden_dy = 64, 64
    num_seed, num_preds = 3, 5

    key = jax.random.PRNGKey(0)
    k_slots, k_slots2, k_params = jax.random.split(key, 3)
    params = _init_params(k_params, slot_dim, action_dim, num_actions,
                          hidden_la, hidden_dy)

    # Case 1: frame-truncation branch, bf16 MXU path (v6e/v7x default policy).
    slots = jax.random.normal(
        k_slots, (2, num_seed + num_preds + 1, 4, slot_dim), jnp.float32)
    _check(slots, params, num_seed, num_preds, tm=256,
           compute_dtype=jnp.bfloat16, tol=2e-3)

    # Case 2: non-multiple row count -> ragged last block, multi-step grid, bf16.
    slots2 = jax.random.normal(
        k_slots2, (3, num_seed + num_preds, 5, slot_dim), jnp.float32)
    _check(slots2, params, num_seed, num_preds, tm=64,
           compute_dtype=jnp.bfloat16, tol=2e-3)

    # Case 3: pure-f32 compute path (bit-faithful to the f32 module semantics).
    _check(slots2, params, num_seed, num_preds, tm=256,
           compute_dtype=jnp.float32, tol=1e-3)

    print("KERNEL_OK")
</pallas_src>

<mosaic_0001>
module attributes {stable_mosaic.version = 11 : i64} {
  func.func @kernel(%arg0: i32, %arg1: memref<48x64xbf16, #tpu.memory_space<vmem>>, %arg2: memref<64x128xbf16, #tpu.memory_space<vmem>>, %arg3: memref<1x128xf32, #tpu.memory_space<vmem>>, %arg4: memref<128x32xbf16, #tpu.memory_space<vmem>>, %arg5: memref<1x32xf32, #tpu.memory_space<vmem>>, %arg6: memref<32x8xf32, #tpu.memory_space<vmem>>, %arg7: memref<1x8xf32, #tpu.memory_space<vmem>>, %arg8: memref<8x32xf32, #tpu.memory_space<vmem>>, %arg9: memref<32x128xbf16, #tpu.memory_space<vmem>>, %arg10: memref<128x32xbf16, #tpu.memory_space<vmem>>, %arg11: memref<1x32xf32, #tpu.memory_space<vmem>>, %arg12: memref<48x128xf32, #tpu.memory_space<vmem>>) attributes {dimension_semantics = [#tpu.dimension_semantics<parallel>], iteration_bounds = array<i64: 2>, scalar_prefetch = 0 : i64, scratch_operands = 0 : i64, tpu.core_type = #tpu.core_type<tc>, window_params = [{transform_indices = @transform_0, window_bounds = array<i64: 48, 64>}, {pipeline_mode = #tpu.pipeline_mode<synchronous>, transform_indices = @transform_1, window_bounds = array<i64: 64, 128>}, {pipeline_mode = #tpu.pipeline_mode<synchronous>, transform_indices = @transform_2, window_bounds = array<i64: 1, 128>}, {pipeline_mode = #tpu.pipeline_mode<synchronous>, transform_indices = @transform_3, window_bounds = array<i64: 128, 32>}, {pipeline_mode = #tpu.pipeline_mode<synchronous>, transform_indices = @transform_4, window_bounds = array<i64: 1, 32>}, {pipeline_mode = #tpu.pipeline_mode<synchronous>, transform_indices = @transform_5, window_bounds = array<i64: 32, 8>}, {pipeline_mode = #tpu.pipeline_mode<synchronous>, transform_indices = @transform_6, window_bounds = array<i64: 1, 8>}, {pipeline_mode = #tpu.pipeline_mode<synchronous>, transform_indices = @transform_7, window_bounds = array<i64: 8, 32>}, {pipeline_mode = #tpu.pipeline_mode<synchronous>, transform_indices = @transform_8, window_bounds = array<i64: 32, 128>}, {pipeline_mode = #tpu.pipeline_mode<synchronous>, transform_indices = @transform_9, window_bounds = array<i64: 128, 32>}, {pipeline_mode = #tpu.pipeline_mode<synchronous>, transform_indices = @transform_10, window_bounds = array<i64: 1, 32>}, {transform_indices = @transform_11, window_bounds = array<i64: 48, 128>}]} {
    %c0 = arith.constant 0 : index
    %c0_0 = arith.constant 0 : index
    %0 = vector.load %arg1[%c0, %c0_0] : memref<48x64xbf16, #tpu.memory_space<vmem>>, vector<48x64xbf16>
    %c0_1 = arith.constant 0 : index
    %c0_2 = arith.constant 0 : index
    %1 = vector.load %arg2[%c0_1, %c0_2] : memref<64x128xbf16, #tpu.memory_space<vmem>>, vector<64x128xbf16>
    %cst = arith.constant dense<0.000000e+00> : vector<48x128xf32>
    %2 = tpu.matmul %0, %1, %cst {dimension_numbers = #tpu.dot_dimension_numbers<[1], [0], [0], [1], [0, 0, 1, 1], [], []>} : vector<48x64xbf16>, vector<64x128xbf16>, vector<48x128xf32> -> vector<48x128xf32>
    %c0_3 = arith.constant 0 : index
    %c0_4 = arith.constant 0 : index
    %3 = vector.load %arg3[%c0_3, %c0_4] : memref<1x128xf32, #tpu.memory_space<vmem>>, vector<1x128xf32>
    %4 = vector.broadcast %3 : vector<1x128xf32> to vector<48x128xf32>
    %5 = arith.addf %2, %4 : vector<48x128xf32>
    %cst_5 = arith.constant 0.000000e+00 : f32
    %6 = vector.broadcast %cst_5 : f32 to vector<48x128xf32>
    %7 = arith.maximumf %5, %6 : vector<48x128xf32>
    %8 = arith.truncf %7 : vector<48x128xf32> to vector<48x128xbf16>
    %c0_6 = arith.constant 0 : index
    %c0_7 = arith.constant 0 : index
    %9 = vector.load %arg4[%c0_6, %c0_7] : memref<128x32xbf16, #tpu.memory_space<vmem>>, vector<128x32xbf16>
    %cst_8 = arith.constant dense<0.000000e+00> : vector<48x32xf32>
    %10 = tpu.matmul %8, %9, %cst_8 {dimension_numbers = #tpu.dot_dimension_numbers<[1], [0], [0], [1], [0, 0, 1, 1], [], []>} : vector<48x128xbf16>, vector<128x32xbf16>, vector<48x32xf32> -> vector<48x32xf32>
    %c0_9 = arith.constant 0 : index
    %c0_10 = arith.constant 0 : index
    %11 = vector.load %arg5[%c0_9, %c0_10] : memref<1x32xf32, #tpu.memory_space<vmem>>, vector<1x32xf32>
    %12 = vector.broadcast %11 : vector<1x32xf32> to vector<48x32xf32>
    %13 = arith.addf %10, %12 : vector<48x32xf32>
    %c0_11 = arith.constant 0 : index
    %c0_12 = arith.constant 0 : index
    %14 = vector.load %arg6[%c0_11, %c0_12] : memref<32x8xf32, #tpu.memory_space<vmem>>, vector<32x8xf32>
    %cst_13 = arith.constant dense<0.000000e+00> : vector<48x8xf32>
    %15 = tpu.matmul %13, %14, %cst_13 {dimension_numbers = #tpu.dot_dimension_numbers<[1], [0], [0], [1], [0, 0, 1, 1], [], []>} : vector<48x32xf32>, vector<32x8xf32>, vector<48x8xf32> -> vector<48x8xf32>
    %cst_14 = arith.constant -2.000000e+00 : f32
    %16 = vector.broadcast %cst_14 : f32 to vector<48x8xf32>
    %17 = arith.mulf %16, %15 : vector<48x8xf32>
    %c0_15 = arith.constant 0 : index
    %c0_16 = arith.constant 0 : index
    %18 = vector.load %arg7[%c0_15, %c0_16] : memref<1x8xf32, #tpu.memory_space<vmem>>, vector<1x8xf32>
    %19 = vector.broadcast %18 : vector<1x8xf32> to vector<48x8xf32>
    %20 = arith.addf %17, %19 : vector<48x8xf32>
    %21 = tpu.iota {dimensions = array<i32: 1>} : vector<48x8xi32>
    %cst_17 = arith.constant dense<0x7F800000> : vector<48xf32>
    %22 = vector.multi_reduction <minimumf>, %20, %cst_17 [1] : vector<48x8xf32> to vector<48xf32>
    %23 = vector.shape_cast %22 : vector<48xf32> to vector<48x1xf32>
    %24 = vector.broadcast %23 : vector<48x1xf32> to vector<48x8xf32>
    %25 = arith.cmpf oeq, %20, %24 : vector<48x8xf32>
    %c8_i32 = arith.constant 8 : i32
    %26 = vector.broadcast %c8_i32 : i32 to vector<48x8xi32>
    %27 = arith.select %25, %21, %26 : vector<48x8xi1>, vector<48x8xi32>
    %cst_18 = arith.constant dense<2147483647> : vector<48xi32>
    %28 = vector.multi_reduction <minsi>, %27, %cst_18 [1] : vector<48x8xi32> to vector<48xi32>
    %29 = vector.shape_cast %28 : vector<48xi32> to vector<48x1xi32>
    %30 = vector.broadcast %29 : vector<48x1xi32> to vector<48x8xi32>
    %31 = arith.cmpi eq, %21, %30 : vector<48x8xi32>
    %32 = arith.extui %31 : vector<48x8xi1> to vector<48x8xi32>
    %33 = arith.sitofp %32 : vector<48x8xi32> to vector<48x8xf32>
    %c0_19 = arith.constant 0 : index
    %c0_20 = arith.constant 0 : index
    %34 = vector.load %arg8[%c0_19, %c0_20] : memref<8x32xf32, #tpu.memory_space<vmem>>, vector<8x32xf32>
    %cst_21 = arith.constant dense<0.000000e+00> : vector<48x32xf32>
    %35 = tpu.matmul %33, %34, %cst_21 {dimension_numbers = #tpu.dot_dimension_numbers<[1], [0], [0], [1], [0, 0, 1, 1], [], []>} : vector<48x8xf32>, vector<8x32xf32>, vector<48x32xf32> -> vector<48x32xf32>
    %36 = arith.truncf %35 : vector<48x32xf32> to vector<48x32xbf16>
    %c0_22 = arith.constant 0 : index
    %c0_23 = arith.constant 0 : index
    %37 = vector.load %arg9[%c0_22, %c0_23] : memref<32x128xbf16, #tpu.memory_space<vmem>>, vector<32x128xbf16>
    %cst_24 = arith.constant dense<0.000000e+00> : vector<48x128xf32>
    %38 = tpu.matmul %36, %37, %cst_24 {dimension_numbers = #tpu.dot_dimension_numbers<[1], [0], [0], [1], [0, 0, 1, 1], [], []>} : vector<48x32xbf16>, vector<32x128xbf16>, vector<48x128xf32> -> vector<48x128xf32>
    %39 = arith.addf %5, %38 : vector<48x128xf32>
    %cst_25 = arith.constant 0.000000e+00 : f32
    %40 = vector.broadcast %cst_25 : f32 to vector<48x128xf32>
    %41 = arith.maximumf %39, %40 : vector<48x128xf32>
    %42 = arith.truncf %41 : vector<48x128xf32> to vector<48x128xbf16>
    %c0_26 = arith.constant 0 : index
    %c0_27 = arith.constant 0 : index
    %43 = vector.load %arg10[%c0_26, %c0_27] : memref<128x32xbf16, #tpu.memory_space<vmem>>, vector<128x32xbf16>
    %cst_28 = arith.constant dense<0.000000e+00> : vector<48x32xf32>
    %44 = tpu.matmul %42, %43, %cst_28 {dimension_numbers = #tpu.dot_dimension_numbers<[1], [0], [0], [1], [0, 0, 1, 1], [], []>} : vector<48x128xbf16>, vector<128x32xbf16>, vector<48x32xf32> -> vector<48x32xf32>
    %c0_29 = arith.constant 0 : index
    %c0_30 = arith.constant 0 : index
    %45 = vector.load %arg11[%c0_29, %c0_30] : memref<1x32xf32, #tpu.memory_space<vmem>>, vector<1x32xf32>
    %46 = vector.broadcast %45 : vector<1x32xf32> to vector<48x32xf32>
    %47 = arith.addf %44, %46 : vector<48x32xf32>
    %48 = vector.extract_strided_slice %0 {offsets = [0, 0], sizes = [48, 32], strides = [1, 1]} : vector<48x64xbf16> to vector<48x32xbf16>
    %49 = arith.extf %48 : vector<48x32xbf16> to vector<48x32xf32>
    %50 = arith.addf %49, %47 : vector<48x32xf32>
    %c0_31 = arith.constant 0 : index
    %c0_32 = arith.constant 0 : index
    %51 = vector.load %arg12[%c0_31, %c0_32] : memref<48x128xf32, #tpu.memory_space<vmem>>, vector<48x32xf32>
    tpu.vector_store %arg12[%c0_31, %c0_32], %50 {strides = array<i32>} : memref<48x128xf32, #tpu.memory_space<vmem>>, vector<48x32xf32>,
    %c0_33 = arith.constant 0 : index
    %c32 = arith.constant 32 : index
    %52 = vector.load %arg12[%c0_33, %c32] : memref<48x128xf32, #tpu.memory_space<vmem>>, vector<48x32xf32>
    tpu.vector_store %arg12[%c0_33, %c32], %35 {strides = array<i32>} : memref<48x128xf32, #tpu.memory_space<vmem>>, vector<48x32xf32>,
    %53 = arith.sitofp %29 : vector<48x1xi32> to vector<48x1xf32>
    %c0_34 = arith.constant 0 : index
    %c64 = arith.constant 64 : index
    %54 = vector.load %arg12[%c0_34, %c64] : memref<48x128xf32, #tpu.memory_space<vmem>>, vector<48x1xf32>
    tpu.vector_store %arg12[%c0_34, %c64], %53 {strides = array<i32>} : memref<48x128xf32, #tpu.memory_space<vmem>>, vector<48x1xf32>,
    %55 = arith.subf %13, %35 : vector<48x32xf32>
    %56 = arith.mulf %55, %55 : vector<48x32xf32>
    %cst_35 = arith.constant dense<0.000000e+00> : vector<48xf32>
    %57 = vector.multi_reduction <add>, %56, %cst_35 [1] : vector<48x32xf32> to vector<48xf32>
    %58 = vector.shape_cast %57 : vector<48xf32> to vector<48x1xf32>
    %c0_36 = arith.constant 0 : index
    %c65 = arith.constant 65 : index
    %59 = vector.load %arg12[%c0_36, %c65] : memref<48x128xf32, #tpu.memory_space<vmem>>, vector<48x1xf32>
    tpu.vector_store %arg12[%c0_36, %c65], %58 {strides = array<i32>} : memref<48x128xf32, #tpu.memory_space<vmem>>, vector<48x1xf32>,
    %cst_37 = arith.constant 0.000000e+00 : f32
    %60 = vector.broadcast %cst_37 : f32 to vector<48x62xf32>
    %c0_38 = arith.constant 0 : index
    %c66 = arith.constant 66 : index
    %61 = vector.load %arg12[%c0_38, %c66] : memref<48x128xf32, #tpu.memory_space<vmem>>, vector<48x62xf32>
    tpu.vector_store %arg12[%c0_38, %c66], %60 {strides = array<i32>} : memref<48x128xf32, #tpu.memory_space<vmem>>, vector<48x62xf32>,
    return
  }
  func.func @transform_0(%arg0: i32) -> (i32, i32) {
    %c0_i32 = arith.constant 0 : i32
    %c0_i32_0 = arith.constant 0 : i32
    return %arg0, %c0_i32 : i32, i32
  }
  func.func @transform_1(%arg0: i32) -> (i32, i32) {
    %c0_i32 = arith.constant 0 : i32
    %c0_i32_0 = arith.constant 0 : i32
    %c0_i32_1 = arith.constant 0 : i32
    return %c0_i32, %c0_i32_0 : i32, i32
  }
  func.func @transform_2(%arg0: i32) -> (i32, i32) {
    %c0_i32 = arith.constant 0 : i32
    %c0_i32_0 = arith.constant 0 : i32
    %c0_i32_1 = arith.constant 0 : i32
    return %c0_i32, %c0_i32_0 : i32, i32
  }
  func.func @transform_3(%arg0: i32) -> (i32, i32) {
    %c0_i32 = arith.constant 0 : i32
    %c0_i32_0 = arith.constant 0 : i32
    %c0_i32_1 = arith.constant 0 : i32
    return %c0_i32, %c0_i32_0 : i32, i32
  }
  func.func @transform_4(%arg0: i32) -> (i32, i32) {
    %c0_i32 = arith.constant 0 : i32
    %c0_i32_0 = arith.constant 0 : i32
    %c0_i32_1 = arith.constant 0 : i32
    return %c0_i32, %c0_i32_0 : i32, i32
  }
  func.func @transform_5(%arg0: i32) -> (i32, i32) {
    %c0_i32 = arith.constant 0 : i32
    %c0_i32_0 = arith.constant 0 : i32
    %c0_i32_1 = arith.constant 0 : i32
    return %c0_i32, %c0_i32_0 : i32, i32
  }
  func.func @transform_6(%arg0: i32) -> (i32, i32) {
    %c0_i32 = arith.constant 0 : i32
    %c0_i32_0 = arith.constant 0 : i32
    %c0_i32_1 = arith.constant 0 : i32
    return %c0_i32, %c0_i32_0 : i32, i32
  }
  func.func @transform_7(%arg0: i32) -> (i32, i32) {
    %c0_i32 = arith.constant 0 : i32
    %c0_i32_0 = arith.constant 0 : i32
    %c0_i32_1 = arith.constant 0 : i32
    return %c0_i32, %c0_i32_0 : i32, i32
  }
  func.func @transform_8(%arg0: i32) -> (i32, i32) {
    %c0_i32 = arith.constant 0 : i32
    %c0_i32_0 = arith.constant 0 : i32
    %c0_i32_1 = arith.constant 0 : i32
    return %c0_i32, %c0_i32_0 : i32, i32
  }
  func.func @transform_9(%arg0: i32) -> (i32, i32) {
    %c0_i32 = arith.constant 0 : i32
    %c0_i32_0 = arith.constant 0 : i32
    %c0_i32_1 = arith.constant 0 : i32
    return %c0_i32, %c0_i32_0 : i32, i32
  }
  func.func @transform_10(%arg0: i32) -> (i32, i32) {
    %c0_i32 = arith.constant 0 : i32
    %c0_i32_0 = arith.constant 0 : i32
    %c0_i32_1 = arith.constant 0 : i32
    return %c0_i32, %c0_i32_0 : i32, i32
  }
  func.func @transform_11(%arg0: i32) -> (i32, i32) {
    %c0_i32 = arith.constant 0 : i32
    %c0_i32_0 = arith.constant 0 : i32
    return %arg0, %c0_i32 : i32, i32
  }
}

</mosaic_0001>

<llo_original>
// kernel: slot_latent_predictor_forward.1
$region0: #{slot_latent_predictor_forward.1}
  #allocation0 [shape = 'u32[]', space=smem, size = 0x4, offset = 0x4, fixed_abs, tag = 'smem constant byte address 0x4 - core index']
  #allocation1 [shape = 'u32[144,128]{1,0:T(1,128)}', space=vmem, size = 0x12000, scoped, tag = 'internal scratch']
  %s0 = inlined_call_operand.vmem [shape: bf16[56,64], index: 0, kind: input, shape index: {}]
  %s1 = inlined_call_operand.vmem [shape: bf16[64,128], index: 1, kind: input, shape index: {}]
  %s2 = inlined_call_operand.vmem [shape: f32[1,128], index: 2, kind: input, shape index: {}]
  %s3 = inlined_call_operand.vmem [shape: bf16[128,32], index: 3, kind: input, shape index: {}]
  %s4 = inlined_call_operand.vmem [shape: f32[1,32], index: 4, kind: input, shape index: {}]
  %s5 = inlined_call_operand.vmem [shape: f32[32,8], index: 5, kind: input, shape index: {}]
  %s6 = inlined_call_operand.vmem [shape: f32[1,8], index: 6, kind: input, shape index: {}]
  %s7 = inlined_call_operand.vmem [shape: f32[8,32], index: 7, kind: input, shape index: {}]
  %s8 = inlined_call_operand.vmem [shape: bf16[32,128], index: 8, kind: input, shape index: {}]
  %s9 = inlined_call_operand.vmem [shape: bf16[128,32], index: 9, kind: input, shape index: {}]
  %s10 = inlined_call_operand.vmem [shape: f32[1,32], index: 10, kind: input, shape index: {}]
  %s11 = inlined_call_operand.vmem [shape: f32[56,128], index: 11, kind: output, shape index: {}]
  %s12 = sld [smem:[#allocation0]]
  $region125: #{slot_latent_predictor_forward.1} parent=0
    _
  %s14 = ssub.s32 1, %s12
  %s15 = scalar_select 0, %s14, %s12
  $region1: #{slot_latent_predictor_forward.1} parent=0
    #allocation2 [shape = 'u8[49152]{0}', space=vmem, size = 0xc000, scoped, tag = 'output window, operand 0']
    loop: start=0, step=1, limit=4
    $region2: #{slot_latent_predictor_forward.1} parent=1 // loop_pre_header
      _
    $region3: #{slot_latent_predictor_forward.1} parent=1 // loop_header
      %s17 = sphi 0, %s21
      %p18 = scmp.ge.s32.totalorder %s17, 4
      %s27 = sphi 0, %s29
      %s30 = sphi 0, %s27
      %s31 = sphi 0, %s30
      %s47 = sphi 0, %s31
      %s51 = sphi 0, %s51
      %s53 = sphi 0, %s51
      %s54 = sphi 0, %s53
      %s68 = sphi 0, %s54
      %s72 = sphi 0, %s72
      %s74 = sphi 0, %s72
      %s75 = sphi 0, %s74
      %s89 = sphi 0, %s75
      %s93 = sphi 0, %s93
      %s95 = sphi 0, %s93
      %s96 = sphi 0, %s95
      %s110 = sphi 0, %s96
      %s114 = sphi 0, %s114
      %s116 = sphi 0, %s114
      %s117 = sphi 0, %s116
      %s131 = sphi 0, %s117
      %s135 = sphi 0, %s135
      %s137 = sphi 0, %s135
      %s138 = sphi 0, %s137
      %s152 = sphi 0, %s138
      %s156 = sphi 0, %s156
      %s158 = sphi 0, %s156
      %s159 = sphi 0, %s158
      %s173 = sphi 0, %s159
      %s177 = sphi 0, %s177
      %s179 = sphi 0, %s177
      %s180 = sphi 0, %s179
      %s194 = sphi 0, %s180
      %s198 = sphi 0, %s198
      %s200 = sphi 0, %s198
      %s201 = sphi 0, %s200
      %s215 = sphi 0, %s201
      %s219 = sphi 0, %s219
      %s221 = sphi 0, %s219
      %s222 = sphi 0, %s221
      %s236 = sphi 0, %s222
      %s240 = sphi 0, %s240
      %s242 = sphi 0, %s240
      %s243 = sphi 0, %s242
      %s257 = sphi 0, %s243
      %s263 = sphi 0, %s265
      %s266 = sphi 0, %s263
      %s267 = sphi 0, %s266
      %s283 = sphi 0, %s267
    $region4: #{slot_latent_predictor_forward.1} parent=1 // loop_header_branch
      %20 = sbr.rel (%p18) target = $region8
    $region5: #{slot_latent_predictor_forward.1} parent=1 // loop_body
      %s22 = ssub.s32 %s17, 1
      %s23 = ssub.s32 %s17, 2
      %s24 = sadd.s32 %s17, 1
      %s25 = ssub.s32 %s17, %s24
      %p26 = scmp.eq.s32.totalorder %s25, 0
      %s28 = sadd.s32 %s27, 1
      %s29 = scalar_select %p26, %s27, %s28
      %p32 = pneg %p26
      %p33 = scmp.eq.s32.totalorder %s17, 1
      %p34 = por %p32, %p33
      %p35 = scmp.ne.s32.totalorder %s27, %s30
      %p36 = scmp.eq.s32.totalorder %s17, 0
      %p37 = por %p35, %p36
      %p38 = scmp.ne.s32.totalorder %s27, %s30
      %p39 = scmp.eq.s32.totalorder %s22, 1
      %p40 = por %p38, %p39
      %p41 = scmp.ne.s32.totalorder %s30, %s31
      %p42 = scmp.eq.s32.totalorder %s22, 0
      %p43 = por %p41, %p42
      %p44 = scmp.ne.s32.totalorder %s30, %s31
      %p45 = scmp.eq.s32.totalorder %s23, 1
      %p46 = por %p44, %p45
      %p48 = scmp.ne.s32.totalorder %s31, %s47
      %p49 = scmp.eq.s32.totalorder %s23, 0
      %p50 = por %p48, %p49
      %s52 = sadd.s32 %s51, 1
      %p55 = scmp.eq.s32.totalorder %s17, 1
      %p56 = scmp.ne.s32.totalorder %s51, %s53
      %p57 = scmp.eq.s32.totalorder %s17, 0
      %p58 = por %p56, %p57
      %p59 = scmp.ne.s32.totalorder %s51, %s53
      %p60 = scmp.eq.s32.totalorder %s22, 1
      %p61 = por %p59, %p60
      %p62 = scmp.ne.s32.totalorder %s53, %s54
      %p63 = scmp.eq.s32.totalorder %s22, 0
      %p64 = por %p62, %p63
      %p65 = scmp.ne.s32.totalorder %s53, %s54
      %p66 = scmp.eq.s32.totalorder %s23, 1
      %p67 = por %p65, %p66
      %p69 = scmp.ne.s32.totalorder %s54, %s68
      %p70 = scmp.eq.s32.totalorder %s23, 0
      %p71 = por %p69, %p70
      %s73 = sadd.s32 %s72, 1
      %p76 = scmp.eq.s32.totalorder %s17, 1
      %p77 = scmp.ne.s32.totalorder %s72, %s74
      %p78 = scmp.eq.s32.totalorder %s17, 0
      %p79 = por %p77, %p78
      %p80 = scmp.ne.s32.totalorder %s72, %s74
      %p81 = scmp.eq.s32.totalorder %s22, 1
      %p82 = por %p80, %p81
      %p83 = scmp.ne.s32.totalorder %s74, %s75
      %p84 = scmp.eq.s32.totalorder %s22, 0
      %p85 = por %p83, %p84
      %p86 = scmp.ne.s32.totalorder %s74, %s75
      %p87 = scmp.eq.s32.totalorder %s23, 1
      %p88 = por %p86, %p87
      %p90 = scmp.ne.s32.totalorder %s75, %s89
      %p91 = scmp.eq.s32.totalorder %s23, 0
      %p92 = por %p90, %p91
      %s94 = sadd.s32 %s93, 1
      %p97 = scmp.eq.s32.totalorder %s17, 1
      %p98 = scmp.ne.s32.totalorder %s93, %s95
      %p99 = scmp.eq.s32.totalorder %s17, 0
      %p100 = por %p98, %p99
      %p101 = scmp.ne.s32.totalorder %s93, %s95
      %p102 = scmp.eq.s32.totalorder %s22, 1
      %p103 = por %p101, %p102
      %p104 = scmp.ne.s32.totalorder %s95, %s96
      %p105 = scmp.eq.s32.totalorder %s22, 0
      %p106 = por %p104, %p105
      %p107 = scmp.ne.s32.totalorder %s95, %s96
      %p108 = scmp.eq.s32.totalorder %s23, 1
      %p109 = por %p107, %p108
      %p111 = scmp.ne.s32.totalorder %s96, %s110
      %p112 = scmp.eq.s32.totalorder %s23, 0
      %p113 = por %p111, %p112
      %s115 = sadd.s32 %s114, 1
      %p118 = scmp.eq.s32.totalorder %s17, 1
      %p119 = scmp.ne.s32.totalorder %s114, %s116
      %p120 = scmp.eq.s32.totalorder %s17, 0
      %p121 = por %p119, %p120
      %p122 = scmp.ne.s32.totalorder %s114, %s116
      %p123 = scmp.eq.s32.totalorder %s22, 1
      %p124 = por %p122, %p123
      %p125 = scmp.ne.s32.totalorder %s116, %s117
      %p126 = scmp.eq.s32.totalorder %s22, 0
      %p127 = por %p125, %p126
      %p128 = scmp.ne.s32.totalorder %s116, %s117
      %p129 = scmp.eq.s32.totalorder %s23, 1
      %p130 = por %p128, %p129
      %p132 = scmp.ne.s32.totalorder %s117, %s131
      %p133 = scmp.eq.s32.totalorder %s23, 0
      %p134 = por %p132, %p133
      %s136 = sadd.s32 %s135, 1
      %p139 = scmp.eq.s32.totalorder %s17, 1
      %p140 = scmp.ne.s32.totalorder %s135, %s137
      %p141 = scmp.eq.s32.totalorder %s17, 0
      %p142 = por %p140, %p141
      %p143 = scmp.ne.s32.totalorder %s135, %s137
      %p144 = scmp.eq.s32.totalorder %s22, 1
      %p145 = por %p143, %p144
      %p146 = scmp.ne.s32.totalorder %s137, %s138
      %p147 = scmp.eq.s32.totalorder %s22, 0
      %p148 = por %p146, %p147
      %p149 = scmp.ne.s32.totalorder %s137, %s138
      %p150 = scmp.eq.s32.totalorder %s23, 1
      %p151 = por %p149, %p150
      %p153 = scmp.ne.s32.totalorder %s138, %s152
      %p154 = scmp.eq.s32.totalorder %s23, 0
      %p155 = por %p153, %p154
      %s157 = sadd.s32 %s156, 1
      %p160 = scmp.eq.s32.totalorder %s17, 1
      %p161 = scmp.ne.s32.totalorder %s156, %s158
      %p162 = scmp.eq.s32.totalorder %s17, 0
      %p163 = por %p161, %p162
      %p164 = scmp.ne.s32.totalorder %s156, %s158
      %p165 = scmp.eq.s32.totalorder %s22, 1
      %p166 = por %p164, %p165
      %p167 = scmp.ne.s32.totalorder %s158, %s159
      %p168 = scmp.eq.s32.totalorder %s22, 0
      %p169 = por %p167, %p168
      %p170 = scmp.ne.s32.totalorder %s158, %s159
      %p171 = scmp.eq.s32.totalorder %s23, 1
      %p172 = por %p170, %p171
      %p174 = scmp.ne.s32.totalorder %s159, %s173
      %p175 = scmp.eq.s32.totalorder %s23, 0
      %p176 = por %p174, %p175
      %s178 = sadd.s32 %s177, 1
      %p181 = scmp.eq.s32.totalorder %s17, 1
      %p182 = scmp.ne.s32.totalorder %s177, %s179
      %p183 = scmp.eq.s32.totalorder %s17, 0
      %p184 = por %p182, %p183
      %p185 = scmp.ne.s32.totalorder %s177, %s179
      %p186 = scmp.eq.s32.totalorder %s22, 1
      %p187 = por %p185, %p186
      %p188 = scmp.ne.s32.totalorder %s179, %s180
      %p189 = scmp.eq.s32.totalorder %s22, 0
      %p190 = por %p188, %p189
      %p191 = scmp.ne.s32.totalorder %s179, %s180
      %p192 = scmp.eq.s32.totalorder %s23, 1
      %p193 = por %p191, %p192
      %p195 = scmp.ne.s32.totalorder %s180, %s194
      %p196 = scmp.eq.s32.totalorder %s23, 0
      %p197 = por %p195, %p196
      %s199 = sadd.s32 %s198, 1
      %p202 = scmp.eq.s32.totalorder %s17, 1
      %p203 = scmp.ne.s32.totalorder %s198, %s200
      %p204 = scmp.eq.s32.totalorder %s17, 0
      %p205 = por %p203, %p204
      %p206 = scmp.ne.s32.totalorder %s198, %s200
      %p207 = scmp.eq.s32.totalorder %s22, 1
      %p208 = por %p206, %p207
      %p209 = scmp.ne.s32.totalorder %s200, %s201
      %p210 = scmp.eq.s32.totalorder %s22, 0
      %p211 = por %p209, %p210
      %p212 = scmp.ne.s32.totalorder %s200, %s201
      %p213 = scmp.eq.s32.totalorder %s23, 1
      %p214 = por %p212, %p213
      %p216 = scmp.ne.s32.totalorder %s201, %s215
      %p217 = scmp.eq.s32.totalorder %s23, 0
      %p218 = por %p216, %p217
      %s220 = sadd.s32 %s219, 1
      %p223 = scmp.eq.s32.totalorder %s17, 1
      %p224 = scmp.ne.s32.totalorder %s219, %s221
      %p225 = scmp.eq.s32.totalorder %s17, 0
      %p226 = por %p224, %p225
      %p227 = scmp.ne.s32.totalorder %s219, %s221
      %p228 = scmp.eq.s32.totalorder %s22, 1
      %p229 = por %p227, %p228
      %p230 = scmp.ne.s32.totalorder %s221, %s222
      %p231 = scmp.eq.s32.totalorder %s22, 0
      %p232 = por %p230, %p231
      %p233 = scmp.ne.s32.totalorder %s221, %s222
      %p234 = scmp.eq.s32.totalorder %s23, 1
      %p235 = por %p233, %p234
      %p237 = scmp.ne.s32.totalorder %s222, %s236
      %p238 = scmp.eq.s32.totalorder %s23, 0
      %p239 = por %p237, %p238
      %s241 = sadd.s32 %s240, 1
      %p244 = scmp.eq.s32.totalorder %s17, 1
      %p245 = scmp.ne.s32.totalorder %s240, %s242
      %p246 = scmp.eq.s32.totalorder %s17, 0
      %p247 = por %p245, %p246
      %p248 = scmp.ne.s32.totalorder %s240, %s242
      %p249 = scmp.eq.s32.totalorder %s22, 1
      %p250 = por %p248, %p249
      %p251 = scmp.ne.s32.totalorder %s242, %s243
      %p252 = scmp.eq.s32.totalorder %s22, 0
      %p253 = por %p251, %p252
      %p254 = scmp.ne.s32.totalorder %s242, %s243
      %p255 = scmp.eq.s32.totalorder %s23, 1
      %p256 = por %p254, %p255
      %p258 = scmp.ne.s32.totalorder %s243, %s257
      %p259 = scmp.eq.s32.totalorder %s23, 0
      %p260 = por %p258, %p259
      %s261 = ssub.s32 %s17, %s24
      %p262 = scmp.eq.s32.totalorder %s261, 0
      %s264 = sadd.s32 %s263, 1
      %s265 = scalar_select %p262, %s263, %s264
      %p268 = pneg %p262
      %p269 = scmp.eq.s32.totalorder %s17, 1
      %p270 = por %p268, %p269
      %p271 = scmp.ne.s32.totalorder %s263, %s266
      %p272 = scmp.eq.s32.totalorder %s17, 0
      %p273 = por %p271, %p272
      %p274 = scmp.ne.s32.totalorder %s263, %s266
      %p275 = scmp.eq.s32.totalorder %s22, 1
      %p276 = por %p274, %p275
      %p277 = scmp.ne.s32.totalorder %s266, %s267
      %p278 = scmp.eq.s32.totalorder %s22, 0
      %p279 = por %p277, %p278
      %p280 = scmp.ne.s32.totalorder %s266, %s267
      %p281 = scmp.eq.s32.totalorder %s23, 1
      %p282 = por %p280, %p281
      %p284 = scmp.ne.s32.totalorder %s267, %s283
      %p285 = scmp.eq.s32.totalorder %s23, 0
      %p286 = por %p284, %p285
      %p287 = scmp.le.s32.totalorder 1, %s17
      %p288 = scmp.lt.s32.totalorder %s17, 3
      %p289 = pnand %p287, %p288
      %p290 = pneg %p289
      // Predicated region
      $region9: #{slot_latent_predictor_forward.1} parent=5 // pred_check
        _
      $region10: #{slot_latent_predictor_forward.1} parent=5 // pred_check_branch
        %292 = sbr.rel (%p289) target = $region12
      $region11: #{slot_latent_predictor_forward.1} parent=5 // pred_region
        %s293 = ssub.s32 %s17, 1
        // Predicated region
        $region13: #{slot_latent_predictor_forward.1} parent=11 // pred_check
          %p294 = pneg %p64
        $region14: #{slot_latent_predictor_forward.1} parent=11 // pred_check_branch
          %296 = sbr.rel (%p294) target = $region16
        $region15: #{slot_latent_predictor_forward.1} parent=11 // pred_region
          _
        $region16: #{slot_latent_predictor_forward.1} parent=11 // pred_fallthru
          _
        // Predicated region
        $region17: #{slot_latent_predictor_forward.1} parent=11 // pred_check
          %p297 = pneg %p85
        $region18: #{slot_latent_predictor_forward.1} parent=11 // pred_check_branch
          %299 = sbr.rel (%p297) target = $region20
        $region19: #{slot_latent_predictor_forward.1} parent=11 // pred_region
          _
        $region20: #{slot_latent_predictor_forward.1} parent=11 // pred_fallthru
          _
        // Predicated region
        $region21: #{slot_latent_predictor_forward.1} parent=11 // pred_check
          %p300 = pneg %p106
        $region22: #{slot_latent_predictor_forward.1} parent=11 // pred_check_branch
          %302 = sbr.rel (%p300) target = $region24
        $region23: #{slot_latent_predictor_forward.1} parent=11 // pred_region
          _
        $region24: #{slot_latent_predictor_forward.1} parent=11 // pred_fallthru
          _
        // Predicated region
        $region25: #{slot_latent_predictor_forward.1} parent=11 // pred_check
          %p303 = pneg %p127
        $region26: #{slot_latent_predictor_forward.1} parent=11 // pred_check_branch
          %305 = sbr.rel (%p303) target = $region28
        $region27: #{slot_latent_predictor_forward.1} parent=11 // pred_region
          _
        $region28: #{slot_latent_predictor_forward.1} parent=11 // pred_fallthru
          _
        // Predicated region
        $region29: #{slot_latent_predictor_forward.1} parent=11 // pred_check
          %p306 = pneg %p148
        $region30: #{slot_latent_predictor_forward.1} parent=11 // pred_check_branch
          %308 = sbr.rel (%p306) target = $region32
        $region31: #{slot_latent_predictor_forward.1} parent=11 // pred_region
          _
        $region32: #{slot_latent_predictor_forward.1} parent=11 // pred_fallthru
          _
        // Predicated region
        $region33: #{slot_latent_predictor_forward.1} parent=11 // pred_check
          %p309 = pneg %p169
        $region34: #{slot_latent_predictor_forward.1} parent=11 // pred_check_branch
          %311 = sbr.rel (%p309) target = $region36
        $region35: #{slot_latent_predictor_forward.1} parent=11 // pred_region
          _
        $region36: #{slot_latent_predictor_forward.1} parent=11 // pred_fallthru
          _
        // Predicated region
        $region37: #{slot_latent_predictor_forward.1} parent=11 // pred_check
          %p312 = pneg %p190
        $region38: #{slot_latent_predictor_forward.1} parent=11 // pred_check_branch
          %314 = sbr.rel (%p312) target = $region40
        $region39: #{slot_latent_predictor_forward.1} parent=11 // pred_region
          _
        $region40: #{slot_latent_predictor_forward.1} parent=11 // pred_fallthru
          _
        // Predicated region
        $region41: #{slot_latent_predictor_forward.1} parent=11 // pred_check
          %p315 = pneg %p211
        $region42: #{slot_latent_predictor_forward.1} parent=11 // pred_check_branch
          %317 = sbr.rel (%p315) target = $region44
        $region43: #{slot_latent_predictor_forward.1} parent=11 // pred_region
          _
        $region44: #{slot_latent_predictor_forward.1} parent=11 // pred_fallthru
          _
        // Predicated region
        $region45: #{slot_latent_predictor_forward.1} parent=11 // pred_check
          %p318 = pneg %p232
        $region46: #{slot_latent_predictor_forward.1} parent=11 // pred_check_branch
          %320 = sbr.rel (%p318) target = $region48
        $region47: #{slot_latent_predictor_forward.1} parent=11 // pred_region
          _
        $region48: #{slot_latent_predictor_forward.1} parent=11 // pred_fallthru
          _
        // Predicated region
        $region49: #{slot_latent_predictor_forward.1} parent=11 // pred_check
          %p321 = pneg %p253
        $region50: #{slot_latent_predictor_forward.1} parent=11 // pred_check_branch
          %323 = sbr.rel (%p321) target = $region52
        $region51: #{slot_latent_predictor_forward.1} parent=11 // pred_region
          _
        $region52: #{slot_latent_predictor_forward.1} parent=11 // pred_fallthru
          _
      $region12: #{slot_latent_predictor_forward.1} parent=5 // pred_fallthru
        _
      %p324 = scmp.lt.s32.totalorder %s17, 2
      // Predicated region
      $region53: #{slot_latent_predictor_forward.1} parent=5 // pred_check
        %p325 = pneg %p324
      $region54: #{slot_latent_predictor_forward.1} parent=5 // pred_check_branch
        %327 = sbr.rel (%p325) target = $region56
      $region55: #{slot_latent_predictor_forward.1} parent=5 // pred_region
        // Predicated region
        $region57: #{slot_latent_predictor_forward.1} parent=55 // pred_check
          %p328 = pneg %p37
        $region58: #{slot_latent_predictor_forward.1} parent=55 // pred_check_branch
          %330 = sbr.rel (%p328) target = $region60
        $region59: #{slot_latent_predictor_forward.1} parent=55 // pred_region
          %s331 = smul.u32 6, %s17
          %s332 = ssub.s32 7, %s331
          %p333 = scmp.lt.s32.totalorder %s332, 6
          %s334 = scalar_select %p333, %s332, 6
          %s335 = smul.u32 64, %s334
          %p336 = scmp.lt.s32.totalorder %s331, 6
          %s337 = scalar_select %p336, %s331, 6
          %s338 = smul.addr %s337, 4
          %s339 = scalar_lea.vmem %s0, %s338
          %s340 = smul.u32 6, %s17
          %s341 = ssub.s32 7, %s340
          %p342 = scmp.lt.s32.totalorder %s341, 6
          %s343 = scalar_select %p342, %s341, 6
          %s344 = smul.u32 64, %s343
        $region60: #{slot_latent_predictor_forward.1} parent=55 // pred_fallthru
          _
      $region56: #{slot_latent_predictor_forward.1} parent=5 // pred_fallthru
        _
      %p345 = scmp.le.s32.totalorder 1, %s17
      %p346 = scmp.lt.s32.totalorder %s17, 3
      %p347 = pnand %p345, %p346
      %p348 = pneg %p347
      // Predicated region
      $region61: #{slot_latent_predictor_forward.1} parent=5 // pred_check
        _
      $region62: #{slot_latent_predictor_forward.1} parent=5 // pred_check_branch
        %350 = sbr.rel (%p347) target = $region64
      $region63: #{slot_latent_predictor_forward.1} parent=5 // pred_region
        %s351 = ssub.s32 %s17, 1
        %s352 = smul.u32 6, %s22
        %s353 = ssub.s32 7, %s352
        %p354 = scmp.lt.s32.totalorder %s353, 6
        %s355 = scalar_select %p354, %s353, 6
        %s356 = smul.u32 64, %s355
        %p357 = scmp.lt.s32.totalorder %s352, 6
        %s358 = scalar_select %p357, %s352, 6
        %s359 = smul.addr %s358, 4
        %s360 = scalar_lea.vmem %s0, %s359
        %p361 = pneg %p43
        %p362 = pneg %p40
        %p363 = pneg %p64
        %p364 = pneg %p61
        %p365 = pneg %p85
        %p366 = pneg %p82
        %p367 = pneg %p106
        %p368 = pneg %p103
        %p369 = pneg %p127
        %p370 = pneg %p124
        %p371 = pneg %p148
        %p372 = pneg %p145
        %p373 = pneg %p169
        %p374 = pneg %p166
        %p375 = pneg %p190
        %p376 = pneg %p187
        %p377 = pneg %p211
        %p378 = pneg %p208
        %p379 = pneg %p232
        %p380 = pneg %p229
        %p381 = pneg %p253
        %p382 = pneg %p250
        %p383 = pneg %p279
        %p384 = pneg %p276
        %s385 = sand.u32 %s266, 1
        %s386 = sand.u32 %s266, 1
        %s387 = smul.addr %s386, 48
        %s388 = scalar_lea.vmem [#allocation2], %s387
        %s389 = smul.u32 6, %s22
        %s390 = ssub.s32 7, %s389
        %p391 = scmp.lt.s32.totalorder %s390, 6
        %s392 = scalar_select %p391, %s390, 6
        %s393 = smul.u32 64, %s392
        %p394 = scmp.lt.s32.totalorder %s389, 6
        %s395 = scalar_select %p394, %s389, 6
        %s396 = smul.addr %s395, 4
        %s397 = scalar_lea.vmem %s0, %s396
        %s398 = smul.u32 6, %s22
        %s399 = ssub.s32 7, %s398
        %p400 = scmp.lt.s32.totalorder %s399, 6
        %s401 = scalar_select %p400, %s399, 6
        %s402 = smul.u32 64, %s401
        %s403 = smul.u32 6, %s22
        %s404 = ssub.s32 7, %s403
        %p405 = scmp.lt.s32.totalorder %s404, 6
        %s406 = scalar_select %p405, %s404, 6
        %s407 = smul.u32 128, %s406
        %v409 = vld [vmem:[%s397] sm:$0xf]
        %v410 = vld [vmem:[%s397 + $0x4] sm:$0xf]
        %v411 = vld [vmem:[%s397 + $0x8] sm:$0xf]
        %v412 = vld [vmem:[%s397 + $0xc] sm:$0xf]
        %v413 = vld [vmem:[%s397 + $0x10] sm:$0xf]
        %v414 = vld [vmem:[%s397 + $0x14] sm:$0xf]
        %v415 = vld [vmem:[%s1] sm:$0xf]
        %v416 = vld [vmem:[%s1 + $0x4] sm:$0xf]
        %v417 = vld [vmem:[%s1 + $0x8] sm:$0xf]
        %v418 = vld [vmem:[%s1 + $0xc] sm:$0xf]
        %v419 = vld [vmem:[%s1 + $0x10] sm:$0xf]
        %v420 = vld [vmem:[%s1 + $0x14] sm:$0xf]
        %v421 = vld [vmem:[%s1 + $0x18] sm:$0xf]
        %v422 = vld [vmem:[%s1 + $0x1c] sm:$0xf]
        %v423 = vld [vmem:[%s2] sm:$0x1]
        %v425 = vlaneseq
        %v426 = vshrl.u32 %v425, 7
        %v427 = vsub.s32 0, %v426
        %v428 = vrot.slane %v423, %v427
        %v436 = vunpack.c.l.b16 %v409
        %v437 = vunpack.c.l.b16 %v410
        %v438 = vunpack.c.l.b16 %v411
        %v439 = vunpack.c.l.b16 %v412
        %v440 = vunpack.c.l.b16 %v413
        %v441 = vunpack.c.l.b16 %v414
        %v442 = vpack.c.b16 %v437, %v436
        %v443 = vpack.c.b16 %v439, %v438
        %v444 = vpack.c.b16 %v441, %v440
        %v453 = vunpack.c.l.b16 %v415
        %v454 = vunpack.c.l.b16 %v416
        %v455 = vunpack.c.l.b16 %v417
        %v456 = vunpack.c.l.b16 %v418
        %v457 = vunpack.c.l.b16 %v419
        %v458 = vunpack.c.l.b16 %v420
        %v459 = vunpack.c.l.b16 %v421
        %v460 = vunpack.c.l.b16 %v422
        %v461 = vpack.c.b16 %v454, %v453
        %v462 = vpack.c.b16 %v456, %v455
        %v463 = vpack.c.b16 %v458, %v457
        %v464 = vpack.c.b16 %v460, %v459
        %vm469 = vcmask 523264
        %v471 = vsel %vm469, %v442, 0
        %v474 = vsel %vm469, %v443, 0
        %v477 = vsel %vm469, %v444, 0
        %479 = vmatprep.subr.bf16.mxu0 0
        %480 = vmatpush1.bf16.msra.mxu0 0
        %481 = vmatprep.subr.bf16.mxu0 0
        %482 = vmatpush1.bf16.msra.mxu0 0
        %483 = vmatprep.subr.bf16.mxu0 0
        %484 = vmatpush1.bf16.msra.mxu0 0
        %485 = vmatprep.subr.bf16.mxu0 0
        %486 = vmatpush1.bf16.msra.mxu0 0
        %487 = vmatprep.subr.bf16.mxu0 0
        %488 = vmatpush1.bf16.msra.mxu0 %v464
        %489 = vmatprep.subr.bf16.mxu0 0
        %490 = vmatpush1.bf16.msra.mxu0 %v463
        %491 = vmatprep.subr.bf16.mxu0 0
        %492 = vmatpush1.bf16.msra.mxu0 %v462
        %493 = vmatprep.subr.bf16.mxu0 0
        %494 = vmatpush1.bf16.msra.mxu0 %v461
        %495 = vmatprep.subr.bf16.mxu0 0
        %496 = vmatpush2.bf16.msra.mxu0 0
        %497 = vmatprep.subr.bf16.mxu0 0
        %498 = vmatpush2.bf16.msra.mxu0 0
        %499 = vmatprep.subr.bf16.mxu0 0
        %500 = vmatpush2.bf16.msra.mxu0 0
        %501 = vmatprep.subr.bf16.mxu0 0
        %502 = vmatpush2.bf16.msra.mxu0 0
        %503 = vmatprep.subr.bf16.mxu0 0
        %504 = vmatpush2.bf16.msra.mxu0 0
        %505 = vmatprep.subr.bf16.mxu0 0
        %506 = vmatpush2.bf16.msra.mxu0 0
        %507 = vmatprep.subr.bf16.mxu0 0
        %508 = vmatpush2.bf16.msra.mxu0 0
        %509 = vmatprep.subr.bf16.mxu0 0
        %510 = vmatpush2.bf16.msra.mxu0 0
        %511 = vmatprep.mubr.bf16.mxu0 0
        %512 = vmatmul.mubr.bf16.gmra.mxu0 %v471
        %v513 = vpop.f32.mrf.mxu0
        %v514 = vadd.f32 %v428, %v513
        %v515 = vpop.f32.mrf.mxu0
        %v516 = vpop.f32.mrf.mxu0
        %v517 = vadd.f32 %v428, %v516
        %v518 = vpop.f32.mrf.mxu0
        %519 = vmatprep.mubr.bf16.mxu0 0
        %520 = vmatmul.mubr.bf16.gmra.mxu0 %v474
        %v521 = vpop.f32.mrf.mxu0
        %v522 = vadd.f32 %v428, %v521
        %v523 = vpop.f32.mrf.mxu0
        %v524 = vpop.f32.mrf.mxu0
        %v525 = vadd.f32 %v428, %v524
        %v526 = vpop.f32.mrf.mxu0
        %527 = vmatprep.mubr.bf16.mxu0 0
        %528 = vmatmul.mubr.bf16.gmra.mxu0 %v477
        %v529 = vpop.f32.mrf.mxu0
        %v530 = vadd.f32 %v428, %v529
        %v531 = vpop.f32.mrf.mxu0
        %v532 = vpop.f32.mrf.mxu0
        %v533 = vadd.f32 %v428, %v532
        %v534 = vpop.f32.mrf.mxu0
        %535 = vdwg.mxu0
        %v536 = vmax.f32 %v514, 0.0
        %v537 = vmax.f32 %v517, 0.0
        %v538 = vmax.f32 %v522, 0.0
        %v539 = vmax.f32 %v525, 0.0
        %v540 = vmax.f32 %v530, 0.0
        %v541 = vmax.f32 %v533, 0.0
        %v542 = vpack.c.bf16 %v537, %v536
        %v543 = vpack.c.bf16 %v539, %v538
        %v544 = vpack.c.bf16 %v541, %v540
        %v545 = vld [vmem:[%s3] sm:$0xf]
        %v546 = vld [vmem:[%s3 + $0x4] sm:$0xf]
        %v547 = vld [vmem:[%s3 + $0x8] sm:$0xf]
        %v548 = vld [vmem:[%s3 + $0xc] sm:$0xf]
        %v549 = vld [vmem:[%s3 + $0x10] sm:$0xf]
        %v550 = vld [vmem:[%s3 + $0x14] sm:$0xf]
        %v551 = vld [vmem:[%s3 + $0x18] sm:$0xf]
        %v552 = vld [vmem:[%s3 + $0x1c] sm:$0xf]
        %v553 = vld [vmem:[%s3 + $0x20] sm:$0xf]
        %v554 = vld [vmem:[%s3 + $0x24] sm:$0xf]
        %v555 = vld [vmem:[%s3 + $0x28] sm:$0xf]
        %v556 = vld [vmem:[%s3 + $0x2c] sm:$0xf]
        %v557 = vld [vmem:[%s3 + $0x30] sm:$0xf]
        %v558 = vld [vmem:[%s3 + $0x34] sm:$0xf]
        %v559 = vld [vmem:[%s3 + $0x38] sm:$0xf]
        %v560 = vld [vmem:[%s3 + $0x3c] sm:$0xf]
        %v561 = vld [vmem:[%s4] sm:$0x1]
        %v563 = vlaneseq
        %v564 = vshrl.u32 %v563, 7
        %v565 = vsub.s32 0, %v564
        %v566 = vrot.slane %v561, %v565
        %v584 = vunpack.c.l.b16 %v545
        %v585 = vunpack.c.l.b16 %v546
        %v586 = vunpack.c.l.b16 %v547
        %v587 = vunpack.c.l.b16 %v548
        %v588 = vunpack.c.l.b16 %v549
        %v589 = vunpack.c.l.b16 %v550
        %v590 = vunpack.c.l.b16 %v551
        %v591 = vunpack.c.l.b16 %v552
        %v592 = vunpack.c.l.b16 %v553
        %v593 = vunpack.c.l.b16 %v554
        %v594 = vunpack.c.l.b16 %v555
        %v595 = vunpack.c.l.b16 %v556
        %v596 = vunpack.c.l.b16 %v557
        %v597 = vunpack.c.l.b16 %v558
        %v598 = vunpack.c.l.b16 %v559
        %v599 = vunpack.c.l.b16 %v560
        %v600 = vpack.c.b16 %v585, %v584
        %v601 = vpack.c.b16 %v587, %v586
        %v602 = vpack.c.b16 %v589, %v588
        %v603 = vpack.c.b16 %v591, %v590
        %v604 = vpack.c.b16 %v593, %v592
        %v605 = vpack.c.b16 %v595, %v594
        %v606 = vpack.c.b16 %v597, %v596
        %v607 = vpack.c.b16 %v599, %v598
        %616 = vmatprep.subr.bf16.mxu0 0
        %617 = vmatpush1.bf16.msra.mxu0 %v607
        %618 = vmatprep.subr.bf16.mxu0 0
        %619 = vmatpush1.bf16.msra.mxu0 %v606
        %620 = vmatprep.subr.bf16.mxu0 0
        %621 = vmatpush1.bf16.msra.mxu0 %v605
        %622 = vmatprep.subr.bf16.mxu0 0
        %623 = vmatpush1.bf16.msra.mxu0 %v604
        %624 = vmatprep.subr.bf16.mxu0 0
        %625 = vmatpush1.bf16.msra.mxu0 %v603
        %626 = vmatprep.subr.bf16.mxu0 0
        %627 = vmatpush1.bf16.msra.mxu0 %v602
        %628 = vmatprep.subr.bf16.mxu0 0
        %629 = vmatpush1.bf16.msra.mxu0 %v601
        %630 = vmatprep.subr.bf16.mxu0 0
        %631 = vmatpush1.bf16.msra.mxu0 %v600
        %632 = vmatprep.subr.bf16.mxu0 0
        %633 = vmatpush2.bf16.msra.mxu0 0
        %634 = vmatprep.subr.bf16.mxu0 0
        %635 = vmatpush2.bf16.msra.mxu0 0
        %636 = vmatprep.subr.bf16.mxu0 0
        %637 = vmatpush2.bf16.msra.mxu0 0
        %638 = vmatprep.subr.bf16.mxu0 0
        %639 = vmatpush2.bf16.msra.mxu0 0
        %640 = vmatprep.subr.bf16.mxu0 0
        %641 = vmatpush2.bf16.msra.mxu0 0
        %642 = vmatprep.subr.bf16.mxu0 0
        %643 = vmatpush2.bf16.msra.mxu0 0
        %644 = vmatprep.subr.bf16.mxu0 0
        %645 = vmatpush2.bf16.msra.mxu0 0
        %646 = vmatprep.subr.bf16.mxu0 0
        %647 = vmatpush2.bf16.msra.mxu0 0
        %648 = vmatprep.mubr.bf16.mxu0 0
        %649 = vmatmul.mubr.bf16.gmra.mxu0 %v542
        %v650 = vpop.f32.mrf.mxu0
        %v651 = vadd.f32 %v566, %v650
        %v652 = vpop.f32.mrf.mxu0
        %v653 = vpop.f32.mrf.mxu0
        %v654 = vadd.f32 %v566, %v653
        %v655 = vpop.f32.mrf.mxu0
        %656 = vmatprep.mubr.bf16.mxu0 0
        %657 = vmatmul.mubr.bf16.gmra.mxu0 %v543
        %v658 = vpop.f32.mrf.mxu0
        %v659 = vadd.f32 %v566, %v658
        %v660 = vpop.f32.mrf.mxu0
        %v661 = vpop.f32.mrf.mxu0
        %v662 = vadd.f32 %v566, %v661
        %v663 = vpop.f32.mrf.mxu0
        %664 = vmatprep.mubr.bf16.mxu0 0
        %665 = vmatmul.mubr.bf16.gmra.mxu0 %v544
        %v666 = vpop.f32.mrf.mxu0
        %v667 = vadd.f32 %v566, %v666
        %v668 = vpop.f32.mrf.mxu0
        %v669 = vpop.f32.mrf.mxu0
        %v670 = vadd.f32 %v566, %v669
        %v671 = vpop.f32.mrf.mxu0
        %672 = vdwg.mxu0
        %v673 = vld [vmem:[%s5] sm:$0xff]
        %v674 = vld [vmem:[%s5 + $0x8] sm:$0xff]
        %v675 = vld [vmem:[%s5 + $0x10] sm:$0xff]
        %v676 = vld [vmem:[%s5 + $0x18] sm:$0xff]
        %vm677 = vcmask 261120
        %v679 = vsel %vm677, %v651, 0
        %v682 = vsel %vm677, %v654, 0
        %v685 = vsel %vm677, %v659, 0
        %v688 = vsel %vm677, %v662, 0
        %v691 = vsel %vm677, %v667, 0
        %v694 = vsel %vm677, %v670, 0
        %696 = vmatprep.subr.mxu0 0.0
        %697 = vmatpush1.msra.mxu0 0.0
        %698 = vmatprep.subr.mxu0 0.0
        %699 = vmatpush1.msra.mxu0 0.0
        %700 = vmatprep.subr.mxu0 0.0
        %701 = vmatpush1.msra.mxu0 0.0
        %702 = vmatprep.subr.mxu0 0.0
        %703 = vmatpush1.msra.mxu0 0.0
        %704 = vmatprep.subr.mxu0 0.0
        %705 = vmatpush1.msra.mxu0 0.0
        %706 = vmatprep.subr.mxu0 0.0
        %707 = vmatpush1.msra.mxu0 0.0
        %708 = vmatprep.subr.mxu0 0.0
        %709 = vmatpush1.msra.mxu0 0.0
        %710 = vmatprep.subr.mxu0 0.0
        %711 = vmatpush1.msra.mxu0 0.0
        %712 = vmatprep.subr.mxu0 0.0
        %713 = vmatpush1.msra.mxu0 0.0
        %714 = vmatprep.subr.mxu0 0.0
        %715 = vmatpush1.msra.mxu0 0.0
        %716 = vmatprep.subr.mxu0 0.0
        %717 = vmatpush1.msra.mxu0 0.0
        %718 = vmatprep.subr.mxu0 0.0
        %719 = vmatpush1.msra.mxu0 0.0
        %720 = vmatprep.subr.mxu0 0.0
        %721 = vmatpush1.msra.mxu0 %v676
        %722 = vmatprep.subr.mxu0 0.0
        %723 = vmatpush1.msra.mxu0 %v675
        %724 = vmatprep.subr.mxu0 0.0
        %725 = vmatpush1.msra.mxu0 %v674
        %726 = vmatprep.subr.mxu0 0.0
        %727 = vmatpush1.msra.mxu0 %v673
        %728 = vmatprep.subr.mxu0 0.0
        %729 = vmatpush2.msra.mxu0 0.0
        %730 = vmatprep.subr.mxu0 0.0
        %731 = vmatpush2.msra.mxu0 0.0
        %732 = vmatprep.subr.mxu0 0.0
        %733 = vmatpush2.msra.mxu0 0.0
        %734 = vmatprep.subr.mxu0 0.0
        %735 = vmatpush2.msra.mxu0 0.0
        %736 = vmatprep.subr.mxu0 0.0
        %737 = vmatpush2.msra.mxu0 0.0
        %738 = vmatprep.subr.mxu0 0.0
        %739 = vmatpush2.msra.mxu0 0.0
        %740 = vmatprep.subr.mxu0 0.0
        %741 = vmatpush2.msra.mxu0 0.0
        %742 = vmatprep.subr.mxu0 0.0
        %743 = vmatpush2.msra.mxu0 0.0
        %744 = vmatprep.subr.mxu0 0.0
        %745 = vmatpush2.msra.mxu0 0.0
        %746 = vmatprep.subr.mxu0 0.0
        %747 = vmatpush2.msra.mxu0 0.0
        %748 = vmatprep.subr.mxu0 0.0
        %749 = vmatpush2.msra.mxu0 0.0
        %750 = vmatprep.subr.mxu0 0.0
        %751 = vmatpush2.msra.mxu0 0.0
        %752 = vmatprep.subr.mxu0 0.0
        %753 = vmatpush2.msra.mxu0 0.0
        %754 = vmatprep.subr.mxu0 0.0
        %755 = vmatpush2.msra.mxu0 0.0
        %756 = vmatprep.subr.mxu0 0.0
        %757 = vmatpush2.msra.mxu0 0.0
        %758 = vmatprep.subr.mxu0 0.0
        %759 = vmatpush2.msra.mxu0 0.0
        %760 = vmatprep.mubr.f32.mxu0 0.0
        %761 = vmatmul.mubr.f32.gmra.mxu0 %v679
        %v762 = vpop.f32.mrf.mxu0
        %v763 = vadd.f32 0.0, %v762
        %v764 = vpop.f32.mrf.mxu0
        %765 = vmatprep.mubr.f32.mxu0 0.0
        %766 = vmatmul.mubr.f32.gmra.mxu0 %v682
        %v767 = vpop.f32.mrf.mxu0
        %v768 = vadd.f32 0.0, %v767
        %v769 = vpop.f32.mrf.mxu0
        %770 = vmatprep.mubr.f32.mxu0 0.0
        %771 = vmatmul.mubr.f32.gmra.mxu0 %v685
        %v772 = vpop.f32.mrf.mxu0
        %v773 = vadd.f32 0.0, %v772
        %v774 = vpop.f32.mrf.mxu0
        %775 = vmatprep.mubr.f32.mxu0 0.0
        %776 = vmatmul.mubr.f32.gmra.mxu0 %v688
        %v777 = vpop.f32.mrf.mxu0
        %v778 = vadd.f32 0.0, %v777
        %v779 = vpop.f32.mrf.mxu0
        %780 = vmatprep.mubr.f32.mxu0 0.0
        %781 = vmatmul.mubr.f32.gmra.mxu0 %v691
        %v782 = vpop.f32.mrf.mxu0
        %v783 = vadd.f32 0.0, %v782
        %v784 = vpop.f32.mrf.mxu0
        %785 = vmatprep.mubr.f32.mxu0 0.0
        %786 = vmatmul.mubr.f32.gmra.mxu0 %v694
        %v787 = vpop.f32.mrf.mxu0
        %v788 = vadd.f32 0.0, %v787
        %v789 = vpop.f32.mrf.mxu0
        %790 = vdwg.mxu0
        %v791 = vmul.f32 %v763, -2.0
        %v792 = vmul.f32 %v768, -2.0
        %v793 = vmul.f32 %v773, -2.0
        %v794 = vmul.f32 %v778, -2.0
        %v795 = vmul.f32 %v783, -2.0
        %v796 = vmul.f32 %v788, -2.0
        %v797 = vld [vmem:[%s6] sm:$0x1]
        %v799 = vlaneseq
        %v800 = vshrl.u32 %v799, 7
        %v801 = vsub.s32 0, %v800
        %v802 = vrot.slane %v797, %v801
        %v804 = vadd.f32 %v791, %v802
        %v805 = vadd.f32 %v792, %v802
        %v806 = vadd.f32 %v793, %v802
        %v807 = vadd.f32 %v794, %v802
        %v808 = vadd.f32 %v795, %v802
        %v809 = vadd.f32 %v796, %v802
        %v810 = vlaneseq
        %v811 = vand.u32 %v810, 127
        %vm812 = vcmask 64512
        %v813 = vsel %vm812, %v804, inf
        %814 = vmin.xlane.f32.xlu0 %v813
        %v815 = vpop.xlane.xlu0 %814
        %v816 = vsel %vm812, %v805, inf
        %817 = vmin.xlane.f32.xlu0 %v816
        %v818 = vpop.xlane.xlu0 %817
        %v819 = vsel %vm812, %v806, inf
        %820 = vmin.xlane.f32.xlu0 %v819
        %v821 = vpop.xlane.xlu0 %820
        %v822 = vsel %vm812, %v807, inf
        %823 = vmin.xlane.f32.xlu0 %v822
        %v824 = vpop.xlane.xlu0 %823
        %v825 = vsel %vm812, %v808, inf
        %826 = vmin.xlane.f32.xlu0 %v825
        %v827 = vpop.xlane.xlu0 %826
        %v828 = vsel %vm812, %v809, inf
        %829 = vmin.xlane.f32.xlu0 %v828
        %v830 = vpop.xlane.xlu0 %829
        %vm831 = vcmp.eq.f32.partialorder %v804, %v815
        %vm832 = vcmp.eq.f32.partialorder %v805, %v818
        %vm833 = vcmp.eq.f32.partialorder %v806, %v821
        %vm834 = vcmp.eq.f32.partialorder %v807, %v824
        %vm835 = vcmp.eq.f32.partialorder %v808, %v827
        %vm836 = vcmp.eq.f32.partialorder %v809, %v830
        %v837 = vsel %vm831, %v811, 8
        %v838 = vsel %vm832, %v811, 8
        %v839 = vsel %vm833, %v811, 8
        %v840 = vsel %vm834, %v811, 8
        %v841 = vsel %vm835, %v811, 8
        %v842 = vsel %vm836, %v811, 8
        %v843 = vsel %vm812, %v837, 2147483647
        %v844 = vand.u32 %v843, 65535
        %v845 = vshra.s32 %v843, 16
        %v846 = vcvt.s32.f32 %v844
        %v847 = vcvt.s32.f32 %v845
        %848 = vmin.xlane.f32.xlu0 %v847
        %v849 = vpop.xlane.xlu0 %848
        %vm850 = vcmp.eq.f32.partialorder %v847, %v849
        %v851 = vsel %vm850, %v846, inf
        %852 = vmin.xlane.f32.xlu0 %v851
        %v853 = vpop.xlane.xlu0 %852
        %v854 = vcvt.f32.s32 %v853
        %v855 = vcvt.f32.s32 %v849
        %v856 = vshll.u32 %v855, 16
        %v857 = vadd.s32 %v856, %v854
        %v858 = vsel %vm812, %v838, 2147483647
        %v859 = vand.u32 %v858, 65535
        %v860 = vshra.s32 %v858, 16
        %v861 = vcvt.s32.f32 %v859
        %v862 = vcvt.s32.f32 %v860
        %863 = vmin.xlane.f32.xlu0 %v862
        %v864 = vpop.xlane.xlu0 %863
        %vm865 = vcmp.eq.f32.partialorder %v862, %v864
        %v866 = vsel %vm865, %v861, inf
        %867 = vmin.xlane.f32.xlu0 %v866
        %v868 = vpop.xlane.xlu0 %867
        %v869 = vcvt.f32.s32 %v868
        %v870 = vcvt.f32.s32 %v864
        %v871 = vshll.u32 %v870, 16
        %v872 = vadd.s32 %v871, %v869
        %v873 = vsel %vm812, %v839, 2147483647
        %v874 = vand.u32 %v873, 65535
        %v875 = vshra.s32 %v873, 16
        %v876 = vcvt.s32.f32 %v874
        %v877 = vcvt.s32.f32 %v875
        %878 = vmin.xlane.f32.xlu0 %v877
        %v879 = vpop.xlane.xlu0 %878
        %vm880 = vcmp.eq.f32.partialorder %v877, %v879
        %v881 = vsel %vm880, %v876, inf
        %882 = vmin.xlane.f32.xlu0 %v881
        %v883 = vpop.xlane.xlu0 %882
        %v884 = vcvt.f32.s32 %v883
        %v885 = vcvt.f32.s32 %v879
        %v886 = vshll.u32 %v885, 16
        %v887 = vadd.s32 %v886, %v884
        %v888 = vsel %vm812, %v840, 2147483647
        %v889 = vand.u32 %v888, 65535
        %v890 = vshra.s32 %v888, 16
        %v891 = vcvt.s32.f32 %v889
        %v892 = vcvt.s32.f32 %v890
        %893 = vmin.xlane.f32.xlu0 %v892
        %v894 = vpop.xlane.xlu0 %893
        %vm895 = vcmp.eq.f32.partialorder %v892, %v894
        %v896 = vsel %vm895, %v891, inf
        %897 = vmin.xlane.f32.xlu0 %v896
        %v898 = vpop.xlane.xlu0 %897
        %v899 = vcvt.f32.s32 %v898
        %v900 = vcvt.f32.s32 %v894
        %v901 = vshll.u32 %v900, 16
        %v902 = vadd.s32 %v901, %v899
        %v903 = vsel %vm812, %v841, 2147483647
        %v904 = vand.u32 %v903, 65535
        %v905 = vshra.s32 %v903, 16
        %v906 = vcvt.s32.f32 %v904
        %v907 = vcvt.s32.f32 %v905
        %908 = vmin.xlane.f32.xlu0 %v907
        %v909 = vpop.xlane.xlu0 %908
        %vm910 = vcmp.eq.f32.partialorder %v907, %v909
        %v911 = vsel %vm910, %v906, inf
        %912 = vmin.xlane.f32.xlu0 %v911
        %v913 = vpop.xlane.xlu0 %912
        %v914 = vcvt.f32.s32 %v913
        %v915 = vcvt.f32.s32 %v909
        %v916 = vshll.u32 %v915, 16
        %v917 = vadd.s32 %v916, %v914
        %v918 = vsel %vm812, %v842, 2147483647
        %v919 = vand.u32 %v918, 65535
        %v920 = vshra.s32 %v918, 16
        %v921 = vcvt.s32.f32 %v919
        %v922 = vcvt.s32.f32 %v920
        %923 = vmin.xlane.f32.xlu0 %v922
        %v924 = vpop.xlane.xlu0 %923
        %vm925 = vcmp.eq.f32.partialorder %v922, %v924
        %v926 = vsel %vm925, %v921, inf
        %927 = vmin.xlane.f32.xlu0 %v926
        %v928 = vpop.xlane.xlu0 %927
        %v929 = vcvt.f32.s32 %v928
        %v930 = vcvt.f32.s32 %v924
        %v931 = vshll.u32 %v930, 16
        %v932 = vadd.s32 %v931, %v929
        %vm933 = vcmp.eq.s32.totalorder %v811, %v857
        %vm934 = vcmp.eq.s32.totalorder %v811, %v872
        %vm935 = vcmp.eq.s32.totalorder %v811, %v887
        %vm936 = vcmp.eq.s32.totalorder %v811, %v902
        %vm937 = vcmp.eq.s32.totalorder %v811, %v917
        %vm938 = vcmp.eq.s32.totalorder %v811, %v932
        %v939 = vsel %vm933, 1, 0
        %v940 = vsel %vm934, 1, 0
        %v941 = vsel %vm935, 1, 0
        %v942 = vsel %vm936, 1, 0
        %v943 = vsel %vm937, 1, 0
        %v944 = vsel %vm938, 1, 0
        %v945 = vcvt.s32.f32 %v939
        %v946 = vcvt.s32.f32 %v940
        %v947 = vcvt.s32.f32 %v941
        %v948 = vcvt.s32.f32 %v942
        %v949 = vcvt.s32.f32 %v943
        %v950 = vcvt.s32.f32 %v944
        %v951 = vld [vmem:[%s7] sm:$0xff]
        %v953 = vsel %vm812, %v945, 0
        %v956 = vsel %vm812, %v946, 0
        %v959 = vsel %vm812, %v947, 0
        %v962 = vsel %vm812, %v948, 0
        %v965 = vsel %vm812, %v949, 0
        %v968 = vsel %vm812, %v950, 0
        %970 = vmatprep.subr.mxu0 0.0
        %971 = vmatpush1.msra.mxu0 0.0
        %972 = vmatprep.subr.mxu0 0.0
        %973 = vmatpush1.msra.mxu0 0.0
        %974 = vmatprep.subr.mxu0 0.0
        %975 = vmatpush1.msra.mxu0 0.0
        %976 = vmatprep.subr.mxu0 0.0
        %977 = vmatpush1.msra.mxu0 0.0
        %978 = vmatprep.subr.mxu0 0.0
        %979 = vmatpush1.msra.mxu0 0.0
        %980 = vmatprep.subr.mxu0 0.0
        %981 = vmatpush1.msra.mxu0 0.0
        %982 = vmatprep.subr.mxu0 0.0
        %983 = vmatpush1.msra.mxu0 0.0
        %984 = vmatprep.subr.mxu0 0.0
        %985 = vmatpush1.msra.mxu0 0.0
        %986 = vmatprep.subr.mxu0 0.0
        %987 = vmatpush1.msra.mxu0 0.0
        %988 = vmatprep.subr.mxu0 0.0
        %989 = vmatpush1.msra.mxu0 0.0
        %990 = vmatprep.subr.mxu0 0.0
        %991 = vmatpush1.msra.mxu0 0.0
        %992 = vmatprep.subr.mxu0 0.0
        %993 = vmatpush1.msra.mxu0 0.0
        %994 = vmatprep.subr.mxu0 0.0
        %995 = vmatpush1.msra.mxu0 0.0
        %996 = vmatprep.subr.mxu0 0.0
        %997 = vmatpush1.msra.mxu0 0.0
        %998 = vmatprep.subr.mxu0 0.0
        %999 = vmatpush1.msra.mxu0 0.0
        %1000 = vmatprep.subr.mxu0 0.0
        %1001 = vmatpush1.msra.mxu0 %v951
        %1002 = vmatprep.subr.mxu0 0.0
        %1003 = vmatpush2.msra.mxu0 0.0
        %1004 = vmatprep.subr.mxu0 0.0
        %1005 = vmatpush2.msra.mxu0 0.0
        %1006 = vmatprep.subr.mxu0 0.0
        %1007 = vmatpush2.msra.mxu0 0.0
        %1008 = vmatprep.subr.mxu0 0.0
        %1009 = vmatpush2.msra.mxu0 0.0
        %1010 = vmatprep.subr.mxu0 0.0
        %1011 = vmatpush2.msra.mxu0 0.0
        %1012 = vmatprep.subr.mxu0 0.0
        %1013 = vmatpush2.msra.mxu0 0.0
        %1014 = vmatprep.subr.mxu0 0.0
        %1015 = vmatpush2.msra.mxu0 0.0
        %1016 = vmatprep.subr.mxu0 0.0
        %1017 = vmatpush2.msra.mxu0 0.0
        %1018 = vmatprep.subr.mxu0 0.0
        %1019 = vmatpush2.msra.mxu0 0.0
        %1020 = vmatprep.subr.mxu0 0.0
        %1021 = vmatpush2.msra.mxu0 0.0
        %1022 = vmatprep.subr.mxu0 0.0
        %1023 = vmatpush2.msra.mxu0 0.0
        %1024 = vmatprep.subr.mxu0 0.0
        %1025 = vmatpush2.msra.mxu0 0.0
        %1026 = vmatprep.subr.mxu0 0.0
        %1027 = vmatpush2.msra.mxu0 0.0
        %1028 = vmatprep.subr.mxu0 0.0
        %1029 = vmatpush2.msra.mxu0 0.0
        %1030 = vmatprep.subr.mxu0 0.0
        %1031 = vmatpush2.msra.mxu0 0.0
        %1032 = vmatprep.subr.mxu0 0.0
        %1033 = vmatpush2.msra.mxu0 0.0
        %1034 = vmatprep.mubr.f32.mxu0 0.0
        %1035 = vmatmul.mubr.f32.gmra.mxu0 %v953
        %v1036 = vpop.f32.mrf.mxu0
        %v1037 = vadd.f32 0.0, %v1036
        %v1038 = vpop.f32.mrf.mxu0
        %1039 = vmatprep.mubr.f32.mxu0 0.0
        %1040 = vmatmul.mubr.f32.gmra.mxu0 %v956
        %v1041 = vpop.f32.mrf.mxu0
        %v1042 = vadd.f32 0.0, %v1041
        %v1043 = vpop.f32.mrf.mxu0
        %1044 = vmatprep.mubr.f32.mxu0 0.0
        %1045 = vmatmul.mubr.f32.gmra.mxu0 %v959
        %v1046 = vpop.f32.mrf.mxu0
        %v1047 = vadd.f32 0.0, %v1046
        %v1048 = vpop.f32.mrf.mxu0
        %1049 = vmatprep.mubr.f32.mxu0 0.0
        %1050 = vmatmul.mubr.f32.gmra.mxu0 %v962
        %v1051 = vpop.f32.mrf.mxu0
        %v1052 = vadd.f32 0.0, %v1051
        %v1053 = vpop.f32.mrf.mxu0
        %1054 = vmatprep.mubr.f32.mxu0 0.0
        %1055 = vmatmul.mubr.f32.gmra.mxu0 %v965
        %v1056 = vpop.f32.mrf.mxu0
        %v1057 = vadd.f32 0.0, %v1056
        %v1058 = vpop.f32.mrf.mxu0
        %1059 = vmatprep.mubr.f32.mxu0 0.0
        %1060 = vmatmul.mubr.f32.gmra.mxu0 %v968
        %v1061 = vpop.f32.mrf.mxu0
        %v1062 = vadd.f32 0.0, %v1061
        %v1063 = vpop.f32.mrf.mxu0
        %1064 = vdwg.mxu0
        %v1065 = vpack.c.bf16 %v1042, %v1037
        %v1066 = vpack.c.bf16 %v1052, %v1047
        %v1067 = vpack.c.bf16 %v1062, %v1057
        %v1068 = vld [vmem:[%s8] sm:$0xf]
        %v1069 = vld [vmem:[%s8 + $0x4] sm:$0xf]
        %v1070 = vld [vmem:[%s8 + $0x8] sm:$0xf]
        %v1071 = vld [vmem:[%s8 + $0xc] sm:$0xf]
        %v1076 = vunpack.c.l.b16 %v1068
        %v1077 = vunpack.c.l.b16 %v1069
        %v1078 = vunpack.c.l.b16 %v1070
        %v1079 = vunpack.c.l.b16 %v1071
        %v1080 = vpack.c.b16 %v1077, %v1076
        %v1081 = vpack.c.b16 %v1079, %v1078
        %v1085 = vsel %vm677, %v1065, 0
        %v1088 = vsel %vm677, %v1066, 0
        %v1091 = vsel %vm677, %v1067, 0
        %1093 = vmatprep.subr.bf16.mxu0 0
        %1094 = vmatpush1.bf16.msra.mxu0 0
        %1095 = vmatprep.subr.bf16.mxu0 0
        %1096 = vmatpush1.bf16.msra.mxu0 0
        %1097 = vmatprep.subr.bf16.mxu0 0
        %1098 = vmatpush1.bf16.msra.mxu0 0
        %1099 = vmatprep.subr.bf16.mxu0 0
        %1100 = vmatpush1.bf16.msra.mxu0 0
        %1101 = vmatprep.subr.bf16.mxu0 0
        %1102 = vmatpush1.bf16.msra.mxu0 0
        %1103 = vmatprep.subr.bf16.mxu0 0
        %1104 = vmatpush1.bf16.msra.mxu0 0
        %1105 = vmatprep.subr.bf16.mxu0 0
        %1106 = vmatpush1.bf16.msra.mxu0 %v1081
        %1107 = vmatprep.subr.bf16.mxu0 0
        %1108 = vmatpush1.bf16.msra.mxu0 %v1080
        %1109 = vmatprep.subr.bf16.mxu0 0
        %1110 = vmatpush2.bf16.msra.mxu0 0
        %1111 = vmatprep.subr.bf16.mxu0 0
        %1112 = vmatpush2.bf16.msra.mxu0 0
        %1113 = vmatprep.subr.bf16.mxu0 0
        %1114 = vmatpush2.bf16.msra.mxu0 0
        %1115 = vmatprep.subr.bf16.mxu0 0
        %1116 = vmatpush2.bf16.msra.mxu0 0
        %1117 = vmatprep.subr.bf16.mxu0 0
        %1118 = vmatpush2.bf16.msra.mxu0 0
        %1119 = vmatprep.subr.bf16.mxu0 0
        %1120 = vmatpush2.bf16.msra.mxu0 0
        %1121 = vmatprep.subr.bf16.mxu0 0
        %1122 = vmatpush2.bf16.msra.mxu0 0
        %1123 = vmatprep.subr.bf16.mxu0 0
        %1124 = vmatpush2.bf16.msra.mxu0 0
        %1125 = vmatprep.mubr.bf16.mxu0 0
        %1126 = vmatmul.mubr.bf16.gmra.mxu0 %v1085
        %v1127 = vpop.f32.mrf.mxu0
        %v1128 = vadd.f32 0.0, %v1127
        %v1129 = vpop.f32.mrf.mxu0
        %v1130 = vpop.f32.mrf.mxu0
        %v1131 = vadd.f32 0.0, %v1130
        %v1132 = vpop.f32.mrf.mxu0
        %1133 = vmatprep.mubr.bf16.mxu0 0
        %1134 = vmatmul.mubr.bf16.gmra.mxu0 %v1088
        %v1135 = vpop.f32.mrf.mxu0
        %v1136 = vadd.f32 0.0, %v1135
        %v1137 = vpop.f32.mrf.mxu0
        %v1138 = vpop.f32.mrf.mxu0
        %v1139 = vadd.f32 0.0, %v1138
        %v1140 = vpop.f32.mrf.mxu0
        %1141 = vmatprep.mubr.bf16.mxu0 0
        %1142 = vmatmul.mubr.bf16.gmra.mxu0 %v1091
        %v1143 = vpop.f32.mrf.mxu0
        %v1144 = vadd.f32 0.0, %v1143
        %v1145 = vpop.f32.mrf.mxu0
        %v1146 = vpop.f32.mrf.mxu0
        %v1147 = vadd.f32 0.0, %v1146
        %v1148 = vpop.f32.mrf.mxu0
        %1149 = vdwg.mxu0
        %v1150 = vadd.f32 %v514, %v1128
        %v1151 = vadd.f32 %v517, %v1131
        %v1152 = vadd.f32 %v522, %v1136
        %v1153 = vadd.f32 %v525, %v1139
        %v1154 = vadd.f32 %v530, %v1144
        %v1155 = vadd.f32 %v533, %v1147
        %v1156 = vmax.f32 %v1150, 0.0
        %v1157 = vmax.f32 %v1151, 0.0
        %v1158 = vmax.f32 %v1152, 0.0
        %v1159 = vmax.f32 %v1153, 0.0
        %v1160 = vmax.f32 %v1154, 0.0
        %v1161 = vmax.f32 %v1155, 0.0
        %v1162 = vpack.c.bf16 %v1157, %v1156
        %v1163 = vpack.c.bf16 %v1159, %v1158
        %v1164 = vpack.c.bf16 %v1161, %v1160
        %v1165 = vld [vmem:[%s9] sm:$0xf]
        %v1166 = vld [vmem:[%s9 + $0x4] sm:$0xf]
        %v1167 = vld [vmem:[%s9 + $0x8] sm:$0xf]
        %v1168 = vld [vmem:[%s9 + $0xc] sm:$0xf]
        %v1169 = vld [vmem:[%s9 + $0x10] sm:$0xf]
        %v1170 = vld [vmem:[%s9 + $0x14] sm:$0xf]
        %v1171 = vld [vmem:[%s9 + $0x18] sm:$0xf]
        %v1172 = vld [vmem:[%s9 + $0x1c] sm:$0xf]
        %v1173 = vld [vmem:[%s9 + $0x20] sm:$0xf]
        %v1174 = vld [vmem:[%s9 + $0x24] sm:$0xf]
        %v1175 = vld [vmem:[%s9 + $0x28] sm:$0xf]
        %v1176 = vld [vmem:[%s9 + $0x2c] sm:$0xf]
        %v1177 = vld [vmem:[%s9 + $0x30] sm:$0xf]
        %v1178 = vld [vmem:[%s9 + $0x34] sm:$0xf]
        %v1179 = vld [vmem:[%s9 + $0x38] sm:$0xf]
        %v1180 = vld [vmem:[%s9 + $0x3c] sm:$0xf]
        %v1181 = vld [vmem:[%s10] sm:$0x1]
        %v1183 = vlaneseq
        %v1184 = vshrl.u32 %v1183, 7
        %v1185 = vsub.s32 0, %v1184
        %v1186 = vrot.slane %v1181, %v1185
        %v1204 = vunpack.c.l.b16 %v1165
        %v1205 = vunpack.c.l.b16 %v1166
        %v1206 = vunpack.c.l.b16 %v1167
        %v1207 = vunpack.c.l.b16 %v1168
        %v1208 = vunpack.c.l.b16 %v1169
        %v1209 = vunpack.c.l.b16 %v1170
        %v1210 = vunpack.c.l.b16 %v1171
        %v1211 = vunpack.c.l.b16 %v1172
        %v1212 = vunpack.c.l.b16 %v1173
        %v1213 = vunpack.c.l.b16 %v1174
        %v1214 = vunpack.c.l.b16 %v1175
        %v1215 = vunpack.c.l.b16 %v1176
        %v1216 = vunpack.c.l.b16 %v1177
        %v1217 = vunpack.c.l.b16 %v1178
        %v1218 = vunpack.c.l.b16 %v1179
        %v1219 = vunpack.c.l.b16 %v1180
        %v1220 = vpack.c.b16 %v1205, %v1204
        %v1221 = vpack.c.b16 %v1207, %v1206
        %v1222 = vpack.c.b16 %v1209, %v1208
        %v1223 = vpack.c.b16 %v1211, %v1210
        %v1224 = vpack.c.b16 %v1213, %v1212
        %v1225 = vpack.c.b16 %v1215, %v1214
        %v1226 = vpack.c.b16 %v1217, %v1216
        %v1227 = vpack.c.b16 %v1219, %v1218
        %1236 = vmatprep.subr.bf16.mxu0 0
        %1237 = vmatpush1.bf16.msra.mxu0 %v1227
        %1238 = vmatprep.subr.bf16.mxu0 0
        %1239 = vmatpush1.bf16.msra.mxu0 %v1226
        %1240 = vmatprep.subr.bf16.mxu0 0
        %1241 = vmatpush1.bf16.msra.mxu0 %v1225
        %1242 = vmatprep.subr.bf16.mxu0 0
        %1243 = vmatpush1.bf16.msra.mxu0 %v1224
        %1244 = vmatprep.subr.bf16.mxu0 0
        %1245 = vmatpush1.bf16.msra.mxu0 %v1223
        %1246 = vmatprep.subr.bf16.mxu0 0
        %1247 = vmatpush1.bf16.msra.mxu0 %v1222
        %1248 = vmatprep.subr.bf16.mxu0 0
        %1249 = vmatpush1.bf16.msra.mxu0 %v1221
        %1250 = vmatprep.subr.bf16.mxu0 0
        %1251 = vmatpush1.bf16.msra.mxu0 %v1220
        %1252 = vmatprep.subr.bf16.mxu0 0
        %1253 = vmatpush2.bf16.msra.mxu0 0
        %1254 = vmatprep.subr.bf16.mxu0 0
        %1255 = vmatpush2.bf16.msra.mxu0 0
        %1256 = vmatprep.subr.bf16.mxu0 0
        %1257 = vmatpush2.bf16.msra.mxu0 0
        %1258 = vmatprep.subr.bf16.mxu0 0
        %1259 = vmatpush2.bf16.msra.mxu0 0
        %1260 = vmatprep.subr.bf16.mxu0 0
        %1261 = vmatpush2.bf16.msra.mxu0 0
        %1262 = vmatprep.subr.bf16.mxu0 0
        %1263 = vmatpush2.bf16.msra.mxu0 0
        %1264 = vmatprep.subr.bf16.mxu0 0
        %1265 = vmatpush2.bf16.msra.mxu0 0
        %1266 = vmatprep.subr.bf16.mxu0 0
        %1267 = vmatpush2.bf16.msra.mxu0 0
        %1268 = vmatprep.mubr.bf16.mxu0 0
        %1269 = vmatmul.mubr.bf16.gmra.mxu0 %v1162
        %v1270 = vpop.f32.mrf.mxu0
        %v1271 = vadd.f32 %v1186, %v1270
        %v1272 = vpop.f32.mrf.mxu0
        %v1273 = vpop.f32.mrf.mxu0
        %v1274 = vadd.f32 %v1186, %v1273
        %v1275 = vpop.f32.mrf.mxu0
        %1276 = vmatprep.mubr.bf16.mxu0 0
        %1277 = vmatmul.mubr.bf16.gmra.mxu0 %v1163
        %v1278 = vpop.f32.mrf.mxu0
        %v1279 = vadd.f32 %v1186, %v1278
        %v1280 = vpop.f32.mrf.mxu0
        %v1281 = vpop.f32.mrf.mxu0
        %v1282 = vadd.f32 %v1186, %v1281
        %v1283 = vpop.f32.mrf.mxu0
        %1284 = vmatprep.mubr.bf16.mxu0 0
        %1285 = vmatmul.mubr.bf16.gmra.mxu0 %v1164
        %v1286 = vpop.f32.mrf.mxu0
        %v1287 = vadd.f32 %v1186, %v1286
        %v1288 = vpop.f32.mrf.mxu0
        %v1289 = vpop.f32.mrf.mxu0
        %v1290 = vadd.f32 %v1186, %v1289
        %v1291 = vpop.f32.mrf.mxu0
        %1292 = vdwg.mxu0
        %v1293 = vunpack.c.l.bf16 %v409
        %v1294 = vunpack.c.l.bf16 %v410
        %v1295 = vunpack.c.l.bf16 %v411
        %v1296 = vunpack.c.l.bf16 %v412
        %v1297 = vunpack.c.l.bf16 %v413
        %v1298 = vunpack.c.l.bf16 %v414
        %v1299 = vadd.f32 %v1293, %v1271
        %v1300 = vadd.f32 %v1294, %v1274
        %v1301 = vadd.f32 %v1295, %v1279
        %v1302 = vadd.f32 %v1296, %v1282
        %v1303 = vadd.f32 %v1297, %v1287
        %v1304 = vadd.f32 %v1298, %v1290
        %1305 = vst.msk [vmem:[%s388] sm:$0xff] %vm677, %v1299
        %1306 = vst.msk [vmem:[%s388 + $0x8] sm:$0xff] %vm677, %v1300
        %1307 = vst.msk [vmem:[%s388 + $0x10] sm:$0xff] %vm677, %v1301
        %1308 = vst.msk [vmem:[%s388 + $0x18] sm:$0xff] %vm677, %v1302
        %1309 = vst.msk [vmem:[%s388 + $0x20] sm:$0xff] %vm677, %v1303
        %1310 = vst.msk [vmem:[%s388 + $0x28] sm:$0xff] %vm677, %v1304
        %1317 = vrot.lane.b32.xlu0 %v1037, 32
        %v1318 = vpop.permute.xlu0 %1317
        %1319 = vrot.lane.b32.xlu0 %v1042, 32
        %v1320 = vpop.permute.xlu0 %1319
        %1321 = vrot.lane.b32.xlu0 %v1047, 32
        %v1322 = vpop.permute.xlu0 %1321
        %1323 = vrot.lane.b32.xlu0 %v1052, 32
        %v1324 = vpop.permute.xlu0 %1323
        %1325 = vrot.lane.b32.xlu0 %v1057, 32
        %v1326 = vpop.permute.xlu0 %1325
        %1327 = vrot.lane.b32.xlu0 %v1062, 32
        %v1328 = vpop.permute.xlu0 %1327
        %vm1335 = vcmask 523520
        %1336 = vst.msk [vmem:[%s388] sm:$0xff] %vm1335, %v1318
        %1337 = vst.msk [vmem:[%s388 + $0x8] sm:$0xff] %vm1335, %v1320
        %1338 = vst.msk [vmem:[%s388 + $0x10] sm:$0xff] %vm1335, %v1322
        %1339 = vst.msk [vmem:[%s388 + $0x18] sm:$0xff] %vm1335, %v1324
        %1340 = vst.msk [vmem:[%s388 + $0x20] sm:$0xff] %vm1335, %v1326
        %1341 = vst.msk [vmem:[%s388 + $0x28] sm:$0xff] %vm1335, %v1328
        %v1342 = vcvt.s32.f32 %v857
        %v1343 = vcvt.s32.f32 %v872
        %v1344 = vcvt.s32.f32 %v887
        %v1345 = vcvt.s32.f32 %v902
        %v1346 = vcvt.s32.f32 %v917
        %v1347 = vcvt.s32.f32 %v932
        %vm1348 = vcmask 531968
        %1349 = vst.msk [vmem:[%s388] sm:$0xff] %vm1348, %v1342
        %1350 = vst.msk [vmem:[%s388 + $0x8] sm:$0xff] %vm1348, %v1343
        %1351 = vst.msk [vmem:[%s388 + $0x10] sm:$0xff] %vm1348, %v1344
        %1352 = vst.msk [vmem:[%s388 + $0x18] sm:$0xff] %vm1348, %v1345
        %1353 = vst.msk [vmem:[%s388 + $0x20] sm:$0xff] %vm1348, %v1346
        %1354 = vst.msk [vmem:[%s388 + $0x28] sm:$0xff] %vm1348, %v1347
        %v1355 = vsub.f32 %v651, %v1037
        %v1356 = vsub.f32 %v654, %v1042
        %v1357 = vsub.f32 %v659, %v1047
        %v1358 = vsub.f32 %v662, %v1052
        %v1359 = vsub.f32 %v667, %v1057
        %v1360 = vsub.f32 %v670, %v1062
        %v1361 = vmul.f32 %v1355, %v1355
        %v1362 = vmul.f32 %v1356, %v1356
        %v1363 = vmul.f32 %v1357, %v1357
        %v1364 = vmul.f32 %v1358, %v1358
        %v1365 = vmul.f32 %v1359, %v1359
        %v1366 = vmul.f32 %v1360, %v1360
        %v1367 = vsel %vm677, %v1361, 0.0
        %1368 = vadd.xlane.f32.xlu0 %v1367
        %v1369 = vpop.xlane.xlu0 %1368
        %v1370 = vsel %vm677, %v1362, 0.0
        %1371 = vadd.xlane.f32.xlu0 %v1370
        %v1372 = vpop.xlane.xlu0 %1371
        %v1373 = vsel %vm677, %v1363, 0.0
        %1374 = vadd.xlane.f32.xlu0 %v1373
        %v1375 = vpop.xlane.xlu0 %1374
        %v1376 = vsel %vm677, %v1364, 0.0
        %1377 = vadd.xlane.f32.xlu0 %v1376
        %v1378 = vpop.xlane.xlu0 %1377
        %v1379 = vsel %vm677, %v1365, 0.0
        %1380 = vadd.xlane.f32.xlu0 %v1379
        %v1381 = vpop.xlane.xlu0 %1380
        %v1382 = vsel %vm677, %v1366, 0.0
        %1383 = vadd.xlane.f32.xlu0 %v1382
        %v1384 = vpop.xlane.xlu0 %1383
        %vm1385 = vcmask 540168
        %1386 = vst.msk [vmem:[%s388] sm:$0xff] %vm1385, %v1369
        %1387 = vst.msk [vmem:[%s388 + $0x8] sm:$0xff] %vm1385, %v1372
        %1388 = vst.msk [vmem:[%s388 + $0x10] sm:$0xff] %vm1385, %v1375
        %1389 = vst.msk [vmem:[%s388 + $0x18] sm:$0xff] %vm1385, %v1378
        %1390 = vst.msk [vmem:[%s388 + $0x20] sm:$0xff] %vm1385, %v1381
        %1391 = vst.msk [vmem:[%s388 + $0x28] sm:$0xff] %vm1385, %v1384
        %vm1392 = vcmask 1048080
        %1393 = vst.msk [vmem:[%s388] sm:$0xff] %vm1392, 0.0
        %1394 = vst.msk [vmem:[%s388 + $0x8] sm:$0xff] %vm1392, 0.0
        %1395 = vst.msk [vmem:[%s388 + $0x10] sm:$0xff] %vm1392, 0.0
        %1396 = vst.msk [vmem:[%s388 + $0x18] sm:$0xff] %vm1392, 0.0
        %1397 = vst.msk [vmem:[%s388 + $0x20] sm:$0xff] %vm1392, 0.0
        %1398 = vst.msk [vmem:[%s388 + $0x28] sm:$0xff] %vm1392, 0.0
        %s1399 = sand.u32 %s266, 1
        %s1400 = sand.u32 %s266, 1
        %s1401 = smul.addr %s1400, 48
        %s1402 = scalar_lea.vmem [#allocation2], %s1401
        // Predicated region
        $region65: #{slot_latent_predictor_forward.1} parent=63 // pred_check
          %p1403 = pneg %p276
        $region66: #{slot_latent_predictor_forward.1} parent=63 // pred_check_branch
          %1405 = sbr.rel (%p1403) target = $region68
        $region67: #{slot_latent_predictor_forward.1} parent=63 // pred_region
          %s1406 = smul.u32 6, %s22
          %s1407 = ssub.s32 7, %s1406
          %p1408 = scmp.lt.s32.totalorder %s1407, 6
          %s1409 = scalar_select %p1408, %s1407, 6
          %s1410 = smul.u32 128, %s1409
          %p1411 = scmp.ne.s32.totalorder 0, %s1410
          %s1412 = smul.addr %s1406, 8
          %s1413 = scalar_lea.vmem %s11, %s1412
          // Predicated region
          $region69: #{slot_latent_predictor_forward.1} parent=67 // pred_check
            %p1414 = pneg %p1411
          $region70: #{slot_latent_predictor_forward.1} parent=67 // pred_check_branch
            %1416 = sbr.rel (%p1414) target = $region72
          $region71: #{slot_latent_predictor_forward.1} parent=67 // pred_region
            // Predicated region
            $region73: #{slot_latent_predictor_forward.1} parent=71 // pred_check
              _
            $region74: #{slot_latent_predictor_forward.1} parent=71 // pred_check_branch
              %1418 = sbr.rel (0) target = $region76
            $region75: #{slot_latent_predictor_forward.1} parent=71 // pred_region
              // Predicated region
              $region95: #{slot_latent_predictor_forward.1} parent=75 // pred_check
                _
              $region96: #{slot_latent_predictor_forward.1} parent=75 // pred_check_branch
                %1479 = sbr.rel (0) target = $region98
              $region97: #{slot_latent_predictor_forward.1} parent=75 // pred_region
                %s1480 = sdiv.u32.pop %s1409, 6
                %s1481 = srem.u32.pop %s1409, 6
                // While loop
                $region99: #{slot_latent_predictor_forward.1} parent=97 // loop_pre_header
                  _
                $region100: #{slot_latent_predictor_forward.1} parent=97 // loop_header
                  %s1483 = sphi 0, %s1485
                  %p1484 = scmp.ge.s32.totalorder %s1483, %s1480
                  %s1488 = sphi 0, %s1505
                  %s1489 = sphi %s1402, %s1508
                  %s1490 = sphi %s1413, %s1509
                $region101: #{slot_latent_predictor_forward.1} parent=97 // loop_header_branch
                  %1487 = sbr.rel (%p1484) target = $region105
                $region102: #{slot_latent_predictor_forward.1} parent=97 // loop_body
                  %v1491 = vld [vmem:[%s1489] sm:$0xff]
                  %1492 = vst [vmem:[%s1490] sm:$0xff] %v1491
                  %v1493 = vld [vmem:[%s1489 + $0x8] sm:$0xff]
                  %1494 = vst [vmem:[%s1490 + $0x8] sm:$0xff] %v1493
                  %v1495 = vld [vmem:[%s1489 + $0x10] sm:$0xff]
                  %1496 = vst [vmem:[%s1490 + $0x10] sm:$0xff] %v1495
                  %v1497 = vld [vmem:[%s1489 + $0x18] sm:$0xff]
                  %1498 = vst [vmem:[%s1490 + $0x18] sm:$0xff] %v1497
                  %v1499 = vld [vmem:[%s1489 + $0x20] sm:$0xff]
                  %1500 = vst [vmem:[%s1490 + $0x20] sm:$0xff] %v1499
                  %v1501 = vld [vmem:[%s1489 + $0x28] sm:$0xff]
                  %1502 = vst [vmem:[%s1490 + $0x28] sm:$0xff] %v1501
                  %s1503 = sadd.s32 1, %s1488
                  %p1504 = scmp.ge.s32.totalorder %s1503, %s1480
                  %s1505 = scalar_select %p1504, 0, %s1503
                  %s1506 = smul.u32 %s1505, 48
                  %s1507 = smul.u32 %s1505, 48
                  %s1508 = scalar_lea.vmem %s1402, %s1506 [#allocation2]
                  %s1509 = scalar_lea.vmem %s1413, %s1507
                $region103: #{slot_latent_predictor_forward.1} parent=97 // loop_footer
                  %s1485 = sadd.s32 %s1483, 1
                $region104: #{slot_latent_predictor_forward.1} parent=97 // loop_footer_branch
                  %1482 = sbr.rel target = $region100
                $region105: #{slot_latent_predictor_forward.1} parent=97 // loop_exit
                  _
                %s1510 = sdiv.u32.pop %s1409, 6
                %s1511 = srem.u32.pop %s1409, 6
                %s1512 = smul.u32 %s1510, 6
                %s1513 = smul.u32 8, %s1512
                %s1514 = scalar_lea.vmem %s1402, %s1513 [#allocation2]
                %s1515 = smul.u32 8, %s1512
                %s1516 = scalar_lea.vmem %s1413, %s1515
                // While loop
                $region106: #{slot_latent_predictor_forward.1} parent=97 // loop_pre_header
                  _
                $region107: #{slot_latent_predictor_forward.1} parent=97 // loop_header
                  %s1518 = sphi 0, %s1520
                  %p1519 = scmp.ge.s32.totalorder %s1518, %s1511
                  %s1523 = sphi 0, %s1530
                  %s1524 = sphi %s1514, %s1533
                  %s1525 = sphi %s1516, %s1534
                $region108: #{slot_latent_predictor_forward.1} parent=97 // loop_header_branch
                  %1522 = sbr.rel (%p1519) target = $region112
                $region109: #{slot_latent_predictor_forward.1} parent=97 // loop_body
                  %v1526 = vld [vmem:[%s1524] sm:$0xff]
                  %1527 = vst [vmem:[%s1525] sm:$0xff] %v1526
                  %s1528 = sadd.s32 1, %s1523
                  %p1529 = scmp.ge.s32.totalorder %s1528, %s1511
                  %s1530 = scalar_select %p1529, 0, %s1528
                  %s1531 = smul.u32 %s1530, 8
                  %s1532 = smul.u32 %s1530, 8
                  %s1533 = scalar_lea.vmem %s1514, %s1531 [#allocation2]
                  %s1534 = scalar_lea.vmem %s1516, %s1532
                $region110: #{slot_latent_predictor_forward.1} parent=97 // loop_footer
                  %s1520 = sadd.s32 %s1518, 1
                $region111: #{slot_latent_predictor_forward.1} parent=97 // loop_footer_branch
                  %1517 = sbr.rel target = $region107
                $region112: #{slot_latent_predictor_forward.1} parent=97 // loop_exit
                  _
              $region98: #{slot_latent_predictor_forward.1} parent=75 // pred_fallthru
                _
              // Predicated region
              $region113: #{slot_latent_predictor_forward.1} parent=75 // pred_check
                _
              $region114: #{slot_latent_predictor_forward.1} parent=75 // pred_check_branch
                %1536 = sbr.rel target = $region116
              $region115: #{slot_latent_predictor_forward.1} parent=75 // pred_region
                _
              $region116: #{slot_latent_predictor_forward.1} parent=75 // pred_fallthru
                _
            $region76: #{slot_latent_predictor_forward.1} parent=71 // pred_fallthru
              _
            // Predicated region
            $region77: #{slot_latent_predictor_forward.1} parent=71 // pred_check
              _
            $region78: #{slot_latent_predictor_forward.1} parent=71 // pred_check_branch
              %1420 = sbr.rel target = $region80
            $region79: #{slot_latent_predictor_forward.1} parent=71 // pred_region
              %s1422 = ssub.s32 256, 1
              %s1423 = sdiv.u32.pop %s1409, 6
              %s1424 = srem.u32.pop %s1409, 6
              // While loop
              $region81: #{slot_latent_predictor_forward.1} parent=79 // loop_pre_header
                _
              $region82: #{slot_latent_predictor_forward.1} parent=79 // loop_header
                %s1426 = sphi 0, %s1428
                %p1427 = scmp.ge.s32.totalorder %s1426, %s1423
                %s1431 = sphi 0, %s1448
                %s1432 = sphi %s1402, %s1451
                %s1433 = sphi %s1413, %s1452
              $region83: #{slot_latent_predictor_forward.1} parent=79 // loop_header_branch
                %1430 = sbr.rel (%p1427) target = $region87
              $region84: #{slot_latent_predictor_forward.1} parent=79 // loop_body
                %v1434 = vld [vmem:[%s1432] sm:%s1422]
                %1435 = vst [vmem:[%s1433] sm:%s1422] %v1434
                %v1436 = vld [vmem:[%s1432 + $0x8] sm:%s1422]
                %1437 = vst [vmem:[%s1433 + $0x8] sm:%s1422] %v1436
                %v1438 = vld [vmem:[%s1432 + $0x10] sm:%s1422]
                %1439 = vst [vmem:[%s1433 + $0x10] sm:%s1422] %v1438
                %v1440 = vld [vmem:[%s1432 + $0x18] sm:%s1422]
                %1441 = vst [vmem:[%s1433 + $0x18] sm:%s1422] %v1440
                %v1442 = vld [vmem:[%s1432 + $0x20] sm:%s1422]
                %1443 = vst [vmem:[%s1433 + $0x20] sm:%s1422] %v1442
                %v1444 = vld [vmem:[%s1432 + $0x28] sm:%s1422]
                %1445 = vst [vmem:[%s1433 + $0x28] sm:%s1422] %v1444
                %s1446 = sadd.s32 1, %s1431
                %p1447 = scmp.ge.s32.totalorder %s1446, %s1423
                %s1448 = scalar_select %p1447, 0, %s1446
                %s1449 = smul.u32 %s1448, 48
                %s1450 = smul.u32 %s1448, 48
                %s1451 = scalar_lea.vmem %s1402, %s1449 [#allocation2]
                %s1452 = scalar_lea.vmem %s1413, %s1450
              $region85: #{slot_latent_predictor_forward.1} parent=79 // loop_footer
                %s1428 = sadd.s32 %s1426, 1
              $region86: #{slot_latent_predictor_forward.1} parent=79 // loop_footer_branch
                %1425 = sbr.rel target = $region82
              $region87: #{slot_latent_predictor_forward.1} parent=79 // loop_exit
                _
              %s1453 = sdiv.u32.pop %s1409, 6
              %s1454 = srem.u32.pop %s1409, 6
              %s1455 = smul.u32 %s1453, 6
              %s1456 = smul.u32 8, %s1455
              %s1457 = scalar_lea.vmem %s1402, %s1456 [#allocation2]
              %s1458 = smul.u32 8, %s1455
              %s1459 = scalar_lea.vmem %s1413, %s1458
              // While loop
              $region88: #{slot_latent_predictor_forward.1} parent=79 // loop_pre_header
                _
              $region89: #{slot_latent_predictor_forward.1} parent=79 // loop_header
                %s1461 = sphi 0, %s1463
                %p1462 = scmp.ge.s32.totalorder %s1461, %s1454
                %s1466 = sphi 0, %s1473
                %s1467 = sphi %s1457, %s1476
                %s1468 = sphi %s1459, %s1477
              $region90: #{slot_latent_predictor_forward.1} parent=79 // loop_header_branch
                %1465 = sbr.rel (%p1462) target = $region94
              $region91: #{slot_latent_predictor_forward.1} parent=79 // loop_body
                %v1469 = vld [vmem:[%s1467] sm:%s1422]
                %1470 = vst [vmem:[%s1468] sm:%s1422] %v1469
                %s1471 = sadd.s32 1, %s1466
                %p1472 = scmp.ge.s32.totalorder %s1471, %s1454
                %s1473 = scalar_select %p1472, 0, %s1471
                %s1474 = smul.u32 %s1473, 8
                %s1475 = smul.u32 %s1473, 8
                %s1476 = scalar_lea.vmem %s1457, %s1474 [#allocation2]
                %s1477 = scalar_lea.vmem %s1459, %s1475
              $region92: #{slot_latent_predictor_forward.1} parent=79 // loop_footer
                %s1463 = sadd.s32 %s1461, 1
              $region93: #{slot_latent_predictor_forward.1} parent=79 // loop_footer_branch
                %1460 = sbr.rel target = $region89
              $region94: #{slot_latent_predictor_forward.1} parent=79 // loop_exit
                _
            $region80: #{slot_latent_predictor_forward.1} parent=71 // pred_fallthru
              _
          $region72: #{slot_latent_predictor_forward.1} parent=67 // pred_fallthru
            _
          %1537 = vnop
        $region68: #{slot_latent_predictor_forward.1} parent=63 // pred_fallthru
          _
      $region64: #{slot_latent_predictor_forward.1} parent=5 // pred_fallthru
        _
      %p1538 = scmp.le.s32.totalorder 2, %s17
      // Predicated region
      $region117: #{slot_latent_predictor_forward.1} parent=5 // pred_check
        %p1539 = pneg %p1538
      $region118: #{slot_latent_predictor_forward.1} parent=5 // pred_check_branch
        %1541 = sbr.rel (%p1539) target = $region120
      $region119: #{slot_latent_predictor_forward.1} parent=5 // pred_region
        %s1542 = ssub.s32 %s17, 2
        // Predicated region
        $region121: #{slot_latent_predictor_forward.1} parent=119 // pred_check
          %p1543 = pneg %p282
        $region122: #{slot_latent_predictor_forward.1} parent=119 // pred_check_branch
          %1545 = sbr.rel (%p1543) target = $region124
        $region123: #{slot_latent_predictor_forward.1} parent=119 // pred_region
          %s1546 = sand.u32 %s267, 1
          %s1547 = sand.u32 %s267, 1
          %s1548 = smul.addr %s1547, 48
          %s1549 = scalar_lea.vmem [#allocation2], %s1548
        $region124: #{slot_latent_predictor_forward.1} parent=119 // pred_fallthru
          _
      $region120: #{slot_latent_predictor_forward.1} parent=5 // pred_fallthru
        _
    $region6: #{slot_latent_predictor_forward.1} parent=1 // loop_footer
      %s21 = sadd.s32 1, %s17
    $region7: #{slot_latent_predictor_forward.1} parent=1 // loop_footer_branch
      %16 = sbr.rel target = $region3
    $region8: #{slot_latent_predictor_forward.1} parent=1 // loop_exit
      _

</llo_original>
